<compile_context>
chip_gen: v7x
topology: tpu7x:2x2x1
jax: 0.10.0
libtpu: 0.0.40
codegen_flags: <defaults>
</compile_context>

<pallas_src>
import functools

import jax
import jax.numpy as jnp
from jax.experimental import pallas as pl
from jax.experimental.pallas import tpu as pltpu

LANE = 128                 # TPU lane width (last-dim tile)
DEFAULT_BATCH_TILE = 128   # MXU-native LHS tile height


def _round_up(n, m):
    return (n + m - 1) // m * m


def _pad_axis(a, axis, target, value=0.0):
    pad = target - a.shape[axis]
    if pad <= 0:
        return a
    widths = [(0, 0)] * a.ndim
    widths[axis] = (0, pad)
    return jnp.pad(a, widths, constant_values=value)


def vae_classifier_kernel(
    x_ref,      # [TB, Dp]      flattened image tile
    eps_ref,    # [TB, Lp]      reparameterization noise tile (f32)
    md_ref,     # [TB, Mdp]     metadata tile
    w1_ref,     # [Dp, Hep]     encoder layer 1
    b1_ref,     # [1, Hep]
    wmulv_ref,  # [Hep, 2*Lp]   fused [Wmu | Wlv]
    bmulv_ref,  # [1, 2*Lp]
    w2md_ref,   # [Mdp, Hcp]    classifier layer 1, metadata rows
    w2z_ref,    # [Lp, Hcp]     classifier layer 1, latent rows
    b2_ref,     # [1, Hcp]
    w3_ref,     # [Hcp, Cp]     classifier output layer
    b3_ref,     # [1, Cp]       (-1e30 in padded class lanes)
    out_ref,    # [TB, Cp]      softmax probabilities (lane-dense store)
    *, l_pad,
):
    f32 = jnp.float32

    # Read each bias exactly once per grid step (f32 vregs).
    b1 = b1_ref[...]
    bmulv = bmulv_ref[...]
    b2 = b2_ref[...]
    b3 = b3_ref[...]

    # ---- vae_OCT encoder ----
    h = jnp.dot(x_ref[...], w1_ref[...], preferred_element_type=f32) + b1
    h = jnp.maximum(h, 0.0)

    # Fused mu/logvar heads: one MXU pass, lane-aligned split at 128 boundary.
    mulv = jnp.dot(h.astype(wmulv_ref.dtype), wmulv_ref[...],
                   preferred_element_type=f32) + bmulv
    mu = mulv[:, :l_pad]
    logvar = mulv[:, l_pad:]

    # reparameterization trick: z = mu + sigma * eps  (f32 elementwise, v5e-safe)
    z = mu + jnp.exp(0.5 * logvar) * eps_ref[...]

    # ---- classifier_OCT(md, z): concat([md, z]) @ W2 folded into two matmuls ----
    h2 = (
        jnp.dot(md_ref[...], w2md_ref[...], preferred_element_type=f32)
        + jnp.dot(z.astype(w2z_ref.dtype), w2z_ref[...], preferred_element_type=f32)
        + b2
    )
    h2 = jnp.maximum(h2, 0.0)

    logits = jnp.dot(h2.astype(w3_ref.dtype), w3_ref[...],
                     preferred_element_type=f32) + b3

    # Numerically stable softmax over the lane-padded class axis; padded class
    # lanes carry a -1e30 bias, so exp underflows to exactly 0 and does not
    # perturb the denominator.
    m = jnp.max(logits, axis=-1, keepdims=True)
    e = jnp.exp(logits - m)
    inv = pl.reciprocal(jnp.sum(e, axis=-1, keepdims=True), approx=True)
    out_ref[...] = (e * inv).astype(out_ref.dtype)


def prepare_padded_params(params, *, d_in, h_enc, latent, d_md, h_cls, n_cls,
                          param_dtype=jnp.float32):
    """One-time host prep: pad all weights to 128-lane-dense shapes, fuse
    Wmu/Wlv into a single weight, and record the padded dimensions."""
    d_pad = _round_up(d_in, LANE)
    he_pad = _round_up(h_enc, LANE)
    l_pad = _round_up(latent, LANE)
    md_pad = _round_up(d_md, LANE)
    hc_pad = _round_up(h_cls, LANE)
    c_pad = _round_up(n_cls, LANE)

    def pad2(a, r, c, value=0.0):
        return _pad_axis(_pad_axis(a, 0, r, value), 1, c, value)

    w1 = pad2(params["w1"], d_pad, he_pad).astype(param_dtype)
    b1 = pad2(params["b1"], 1, he_pad).astype(jnp.float32)

    wmu = pad2(params["wmu"], he_pad, l_pad)
    wlv = pad2(params["wlv"], he_pad, l_pad)
    wmulv = jnp.concatenate([wmu, wlv], axis=1).astype(param_dtype)
    bmulv = jnp.concatenate(
        [pad2(params["bmu"], 1, l_pad), pad2(params["blv"], 1, l_pad)],
        axis=1).astype(jnp.float32)

    w2md = pad2(params["w2_md"], md_pad, hc_pad).astype(param_dtype)
    w2z = pad2(params["w2_z"], l_pad, hc_pad).astype(param_dtype)
    b2 = pad2(params["b2"], 1, hc_pad).astype(jnp.float32)

    w3 = pad2(params["w3"], hc_pad, c_pad).astype(param_dtype)
    # Padded class lanes get a huge negative bias -> zero softmax weight.
    b3 = _pad_axis(params["b3"], 1, c_pad, value=-1e30).astype(jnp.float32)

    dims = dict(d_in=d_in, latent=latent, d_md=d_md, n_cls=n_cls,
                d_pad=d_pad, he_pad=he_pad, l_pad=l_pad,
                md_pad=md_pad, hc_pad=hc_pad, c_pad=c_pad)
    return dict(w1=w1, b1=b1, wmulv=wmulv, bmulv=bmulv,
                w2md=w2md, w2z=w2z, b2=b2, w3=w3, b3=b3, dims=dims)


def vae_classifier_oct(x_nchw, md, eps, pparams, *, batch_tile=DEFAULT_BATCH_TILE):
    """Host wrapper. x_nchw: [B, C, H, W], md: [B, Dmd], eps: [B, L]."""
    dims = pparams["dims"]
    B = x_nchw.shape[0]
    param_dtype = pparams["w1"].dtype

    # NCHW row-major flatten (matches torch .view(B, -1)), lane + batch padding.
    x = _pad_axis(x_nchw.reshape(B, -1), 1, dims["d_pad"]).astype(param_dtype)
    md_p = _pad_axis(md, 1, dims["md_pad"]).astype(param_dtype)
    eps_p = _pad_axis(eps, 1, dims["l_pad"]).astype(jnp.float32)

    tb = batch_tile
    b_pad = _round_up(B, tb)
    x = _pad_axis(x, 0, b_pad)
    md_p = _pad_axis(md_p, 0, b_pad)
    eps_p = _pad_axis(eps_p, 0, b_pad)

    row = lambda i: (i, 0)     # batch-tiled operands: new block each grid step
    whole = lambda i: (0, 0)   # weights/biases: constant block -> VMEM-resident

    grid = (b_pad // tb,)
    in_specs = [
        pl.BlockSpec((tb, dims["d_pad"]), row),
        pl.BlockSpec((tb, dims["l_pad"]), row),
        pl.BlockSpec((tb, dims["md_pad"]), row),
        pl.BlockSpec(pparams["w1"].shape, whole),
        pl.BlockSpec(pparams["b1"].shape, whole),
        pl.BlockSpec(pparams["wmulv"].shape, whole),
        pl.BlockSpec(pparams["bmulv"].shape, whole),
        pl.BlockSpec(pparams["w2md"].shape, whole),
        pl.BlockSpec(pparams["w2z"].shape, whole),
        pl.BlockSpec(pparams["b2"].shape, whole),
        pl.BlockSpec(pparams["w3"].shape, whole),
        pl.BlockSpec(pparams["b3"].shape, whole),
    ]
    out_specs = pl.BlockSpec((tb, dims["c_pad"]), row)

    kernel = functools.partial(vae_classifier_kernel, l_pad=dims["l_pad"])
    out_padded = pl.pallas_call(
        kernel,
        grid=grid,
        in_specs=in_specs,
        out_specs=out_specs,
        out_shape=jax.ShapeDtypeStruct((b_pad, dims["c_pad"]), jnp.float32),
        compiler_params=pltpu.CompilerParams(
            dimension_semantics=("parallel",),
            vmem_limit_bytes=48 * 1024 * 1024,
        ),
    )(x, eps_p, md_p,
      pparams["w1"], pparams["b1"], pparams["wmulv"], pparams["bmulv"],
      pparams["w2md"], pparams["w2z"], pparams["b2"],
      pparams["w3"], pparams["b3"])

    return out_padded[:B, :dims["n_cls"]]


def _reference(x_nchw, md, eps, p):
    """Pure-JAX reference of the same forward pass (unpadded params)."""
    B = x_nchw.shape[0]
    x = x_nchw.reshape(B, -1)
    h = jax.nn.relu(x @ p["w1"] + p["b1"])
    mu = h @ p["wmu"] + p["bmu"]
    logvar = h @ p["wlv"] + p["blv"]
    z = mu + jnp.exp(0.5 * logvar) * eps
    cat = jnp.concatenate([md, z], axis=-1)
    w2 = jnp.concatenate([p["w2_md"], p["w2_z"]], axis=0)
    h2 = jax.nn.relu(cat @ w2 + p["b2"])
    logits = h2 @ p["w3"] + p["b3"]
    return jax.nn.softmax(logits, axis=-1)


def _init_params(key, d_in, h_enc, latent, d_md, h_cls, n_cls):
    """Deterministic PyTorch-style init: U(-1/sqrt(fan_in), 1/sqrt(fan_in))."""
    ks = jax.random.split(key, 11)

    def lin(kw, kb, fan_in, fan_out):
        bound = 1.0 / jnp.sqrt(jnp.float32(fan_in))
        w = jax.random.uniform(kw, (fan_in, fan_out), jnp.float32, -bound, bound)
        b = jax.random.uniform(kb, (1, fan_out), jnp.float32, -bound, bound)
        return w, b

    w1, b1 = lin(ks[0], ks[1], d_in, h_enc)
    wmu, bmu = lin(ks[2], ks[3], h_enc, latent)
    wlv, blv = lin(ks[4], ks[5], h_enc, latent)
    # classifier first layer acts on concat([md, z]) of width d_md + latent
    bound2 = 1.0 / jnp.sqrt(jnp.float32(d_md + latent))
    w2_md = jax.random.uniform(ks[6], (d_md, h_cls), jnp.float32, -bound2, bound2)
    w2_z = jax.random.uniform(ks[7], (latent, h_cls), jnp.float32, -bound2, bound2)
    b2 = jax.random.uniform(ks[8], (1, h_cls), jnp.float32, -bound2, bound2)
    w3, b3 = lin(ks[9], ks[10], h_cls, n_cls)
    return dict(w1=w1, b1=b1, wmu=wmu, bmu=bmu, wlv=wlv, blv=blv,
                w2_md=w2_md, w2_z=w2_z, b2=b2, w3=w3, b3=b3)


if __name__ == "__main__":
    # Small shapes consistent with the FC-VAE forward.
    B, C, H, W = 2, 4, 16, 16        # image: NCHW
    D_IN = C * H * W                 # 1024 flattened features
    H_ENC = 32                       # encoder hidden
    LATENT = 16                      # latent dim (z)
    D_MD = 8                         # metadata dim
    H_CLS = 32                       # classifier hidden
    N_CLS = 4                        # number of classes

    root = jax.random.PRNGKey(0)
    k_x, k_md, k_eps, k_par = jax.random.split(root, 4)

    x = jax.random.normal(k_x, (B, C, H, W), jnp.float32)
    md = jax.random.normal(k_md, (B, D_MD), jnp.float32)
    eps = jax.random.normal(k_eps, (B, LATENT), jnp.float32)  # fixed reparam noise
    params = _init_params(k_par, D_IN, H_ENC, LATENT, D_MD, H_CLS, N_CLS)

    # param_dtype=jnp.bfloat16 halves HBM weight traffic on v6e/v7x (f32 accum
    # is preserved); kept f32 here so the self-test tolerance stays tight.
    pparams = prepare_padded_params(
        params, d_in=D_IN, h_enc=H_ENC, latent=LATENT,
        d_md=D_MD, h_cls=H_CLS, n_cls=N_CLS, param_dtype=jnp.float32)

    pred = jax.block_until_ready(vae_classifier_oct(x, md, eps, pparams))
    ref = jax.block_until_ready(_reference(x, md, eps, params))

    assert pred.shape == (B, N_CLS), pred.shape
    assert jnp.all(jnp.isfinite(pred))
    # tolerance relaxed vs. exact-divide version: softmax denom uses the EUP
    # approximate reciprocal (pl.reciprocal(approx=True)).
    assert jnp.allclose(pred, ref, atol=2e-3, rtol=2e-3), (pred, ref)

    print("KERNEL_OK")
</pallas_src>

<mosaic_0001>
module attributes {stable_mosaic.version = 11 : i64} {
  func.func @vae_classifier_kernel(%arg0: i32, %arg1: memref<128x1024xf32, #tpu.memory_space<vmem>>, %arg2: memref<128x128xf32, #tpu.memory_space<vmem>>, %arg3: memref<128x128xf32, #tpu.memory_space<vmem>>, %arg4: memref<1024x128xf32, #tpu.memory_space<vmem>>, %arg5: memref<1x128xf32, #tpu.memory_space<vmem>>, %arg6: memref<128x256xf32, #tpu.memory_space<vmem>>, %arg7: memref<1x256xf32, #tpu.memory_space<vmem>>, %arg8: memref<128x128xf32, #tpu.memory_space<vmem>>, %arg9: memref<128x128xf32, #tpu.memory_space<vmem>>, %arg10: memref<1x128xf32, #tpu.memory_space<vmem>>, %arg11: memref<128x128xf32, #tpu.memory_space<vmem>>, %arg12: memref<1x128xf32, #tpu.memory_space<vmem>>, %arg13: memref<128x128xf32, #tpu.memory_space<vmem>>) attributes {dimension_semantics = [#tpu.dimension_semantics<parallel>], iteration_bounds = array<i64: 1>, scalar_prefetch = 0 : i64, scratch_operands = 0 : i64, tpu.core_type = #tpu.core_type<tc>, window_params = [{transform_indices = @transform_0, window_bounds = array<i64: 128, 1024>}, {transform_indices = @transform_1, window_bounds = array<i64: 128, 128>}, {transform_indices = @transform_2, window_bounds = array<i64: 128, 128>}, {pipeline_mode = #tpu.pipeline_mode<synchronous>, transform_indices = @transform_3, window_bounds = array<i64: 1024, 128>}, {pipeline_mode = #tpu.pipeline_mode<synchronous>, transform_indices = @transform_4, window_bounds = array<i64: 1, 128>}, {pipeline_mode = #tpu.pipeline_mode<synchronous>, transform_indices = @transform_5, window_bounds = array<i64: 128, 256>}, {pipeline_mode = #tpu.pipeline_mode<synchronous>, transform_indices = @transform_6, window_bounds = array<i64: 1, 256>}, {pipeline_mode = #tpu.pipeline_mode<synchronous>, transform_indices = @transform_7, window_bounds = array<i64: 128, 128>}, {pipeline_mode = #tpu.pipeline_mode<synchronous>, transform_indices = @transform_8, window_bounds = array<i64: 128, 128>}, {pipeline_mode = #tpu.pipeline_mode<synchronous>, transform_indices = @transform_9, window_bounds = array<i64: 1, 128>}, {pipeline_mode = #tpu.pipeline_mode<synchronous>, transform_indices = @transform_10, window_bounds = array<i64: 128, 128>}, {pipeline_mode = #tpu.pipeline_mode<synchronous>, transform_indices = @transform_11, window_bounds = array<i64: 1, 128>}, {transform_indices = @transform_12, window_bounds = array<i64: 128, 128>}]} {
    %c0 = arith.constant 0 : index
    %c0_0 = arith.constant 0 : index
    %0 = vector.load %arg5[%c0, %c0_0] : memref<1x128xf32, #tpu.memory_space<vmem>>, vector<1x128xf32>
    %c0_1 = arith.constant 0 : index
    %c0_2 = arith.constant 0 : index
    %1 = vector.load %arg7[%c0_1, %c0_2] : memref<1x256xf32, #tpu.memory_space<vmem>>, vector<1x256xf32>
    %c0_3 = arith.constant 0 : index
    %c0_4 = arith.constant 0 : index
    %2 = vector.load %arg10[%c0_3, %c0_4] : memref<1x128xf32, #tpu.memory_space<vmem>>, vector<1x128xf32>
    %c0_5 = arith.constant 0 : index
    %c0_6 = arith.constant 0 : index
    %3 = vector.load %arg12[%c0_5, %c0_6] : memref<1x128xf32, #tpu.memory_space<vmem>>, vector<1x128xf32>
    %c0_7 = arith.constant 0 : index
    %c0_8 = arith.constant 0 : index
    %4 = vector.load %arg1[%c0_7, %c0_8] : memref<128x1024xf32, #tpu.memory_space<vmem>>, vector<128x1024xf32>
    %c0_9 = arith.constant 0 : index
    %c0_10 = arith.constant 0 : index
    %5 = vector.load %arg4[%c0_9, %c0_10] : memref<1024x128xf32, #tpu.memory_space<vmem>>, vector<1024x128xf32>
    %cst = arith.constant dense<0.000000e+00> : vector<128x128xf32>
    %6 = tpu.matmul %4, %5, %cst {dimension_numbers = #tpu.dot_dimension_numbers<[1], [0], [0], [1], [0, 0, 1, 1], [], []>} : vector<128x1024xf32>, vector<1024x128xf32>, vector<128x128xf32> -> vector<128x128xf32>
    %7 = vector.broadcast %0 : vector<1x128xf32> to vector<128x128xf32>
    %8 = arith.addf %6, %7 : vector<128x128xf32>
    %cst_11 = arith.constant 0.000000e+00 : f32
    %9 = vector.broadcast %cst_11 : f32 to vector<128x128xf32>
    %10 = arith.maximumf %8, %9 : vector<128x128xf32>
    %c0_12 = arith.constant 0 : index
    %c0_13 = arith.constant 0 : index
    %11 = vector.load %arg6[%c0_12, %c0_13] : memref<128x256xf32, #tpu.memory_space<vmem>>, vector<128x256xf32>
    %cst_14 = arith.constant dense<0.000000e+00> : vector<128x256xf32>
    %12 = tpu.matmul %10, %11, %cst_14 {dimension_numbers = #tpu.dot_dimension_numbers<[1], [0], [0], [1], [0, 0, 1, 1], [], []>} : vector<128x128xf32>, vector<128x256xf32>, vector<128x256xf32> -> vector<128x256xf32>
    %13 = vector.broadcast %1 : vector<1x256xf32> to vector<128x256xf32>
    %14 = arith.addf %12, %13 : vector<128x256xf32>
    %15 = vector.extract_strided_slice %14 {offsets = [0, 0], sizes = [128, 128], strides = [1, 1]} : vector<128x256xf32> to vector<128x128xf32>
    %16 = vector.extract_strided_slice %14 {offsets = [0, 128], sizes = [128, 128], strides = [1, 1]} : vector<128x256xf32> to vector<128x128xf32>
    %cst_15 = arith.constant 5.000000e-01 : f32
    %17 = vector.broadcast %cst_15 : f32 to vector<128x128xf32>
    %18 = arith.mulf %17, %16 : vector<128x128xf32>
    %19 = math.exp %18 : vector<128x128xf32>
    %c0_16 = arith.constant 0 : index
    %c0_17 = arith.constant 0 : index
    %20 = vector.load %arg2[%c0_16, %c0_17] : memref<128x128xf32, #tpu.memory_space<vmem>>, vector<128x128xf32>
    %21 = arith.mulf %19, %20 : vector<128x128xf32>
    %22 = arith.addf %15, %21 : vector<128x128xf32>
    %c0_18 = arith.constant 0 : index
    %c0_19 = arith.constant 0 : index
    %23 = vector.load %arg3[%c0_18, %c0_19] : memref<128x128xf32, #tpu.memory_space<vmem>>, vector<128x128xf32>
    %c0_20 = arith.constant 0 : index
    %c0_21 = arith.constant 0 : index
    %24 = vector.load %arg8[%c0_20, %c0_21] : memref<128x128xf32, #tpu.memory_space<vmem>>, vector<128x128xf32>
    %cst_22 = arith.constant dense<0.000000e+00> : vector<128x128xf32>
    %25 = tpu.matmul %23, %24, %cst_22 {dimension_numbers = #tpu.dot_dimension_numbers<[1], [0], [0], [1], [0, 0, 1, 1], [], []>} : vector<128x128xf32>, vector<128x128xf32>, vector<128x128xf32> -> vector<128x128xf32>
    %c0_23 = arith.constant 0 : index
    %c0_24 = arith.constant 0 : index
    %26 = vector.load %arg9[%c0_23, %c0_24] : memref<128x128xf32, #tpu.memory_space<vmem>>, vector<128x128xf32>
    %cst_25 = arith.constant dense<0.000000e+00> : vector<128x128xf32>
    %27 = tpu.matmul %22, %26, %cst_25 {dimension_numbers = #tpu.dot_dimension_numbers<[1], [0], [0], [1], [0, 0, 1, 1], [], []>} : vector<128x128xf32>, vector<128x128xf32>, vector<128x128xf32> -> vector<128x128xf32>
    %28 = arith.addf %25, %27 : vector<128x128xf32>
    %29 = vector.broadcast %2 : vector<1x128xf32> to vector<128x128xf32>
    %30 = arith.addf %28, %29 : vector<128x128xf32>
    %cst_26 = arith.constant 0.000000e+00 : f32
    %31 = vector.broadcast %cst_26 : f32 to vector<128x128xf32>
    %32 = arith.maximumf %30, %31 : vector<128x128xf32>
    %c0_27 = arith.constant 0 : index
    %c0_28 = arith.constant 0 : index
    %33 = vector.load %arg11[%c0_27, %c0_28] : memref<128x128xf32, #tpu.memory_space<vmem>>, vector<128x128xf32>
    %cst_29 = arith.constant dense<0.000000e+00> : vector<128x128xf32>
    %34 = tpu.matmul %32, %33, %cst_29 {dimension_numbers = #tpu.dot_dimension_numbers<[1], [0], [0], [1], [0, 0, 1, 1], [], []>} : vector<128x128xf32>, vector<128x128xf32>, vector<128x128xf32> -> vector<128x128xf32>
    %35 = vector.broadcast %3 : vector<1x128xf32> to vector<128x128xf32>
    %36 = arith.addf %34, %35 : vector<128x128xf32>
    %cst_30 = arith.constant dense<0xFF800000> : vector<128xf32>
    %37 = vector.multi_reduction <maximumf>, %36, %cst_30 [1] : vector<128x128xf32> to vector<128xf32>
    %38 = vector.shape_cast %37 : vector<128xf32> to vector<128x1xf32>
    %39 = vector.broadcast %38 : vector<128x1xf32> to vector<128x128xf32>
    %40 = arith.subf %36, %39 : vector<128x128xf32>
    %41 = math.exp %40 : vector<128x128xf32>
    %cst_31 = arith.constant dense<0.000000e+00> : vector<128xf32>
    %42 = vector.multi_reduction <add>, %41, %cst_31 [1] : vector<128x128xf32> to vector<128xf32>
    %43 = vector.shape_cast %42 : vector<128xf32> to vector<128x1xf32>
    %44 = tpu.reciprocal %43 {approx = true} : vector<128x1xf32> -> vector<128x1xf32>
    %45 = vector.broadcast %44 : vector<128x1xf32> to vector<128x128xf32>
    %46 = arith.mulf %41, %45 : vector<128x128xf32>
    %c0_32 = arith.constant 0 : index
    %c0_33 = arith.constant 0 : index
    %47 = vector.load %arg13[%c0_32, %c0_33] : memref<128x128xf32, #tpu.memory_space<vmem>>, vector<128x128xf32>
    tpu.vector_store %arg13[%c0_32, %c0_33], %46 {strides = array<i32>} : memref<128x128xf32, #tpu.memory_space<vmem>>, vector<128x128xf32>,
    return
  }
  func.func @transform_0(%arg0: i32) -> (i32, i32) {
    %c0_i32 = arith.constant 0 : i32
    %c0_i32_0 = arith.constant 0 : i32
    return %arg0, %c0_i32 : i32, i32
  }
  func.func @transform_1(%arg0: i32) -> (i32, i32) {
    %c0_i32 = arith.constant 0 : i32
    %c0_i32_0 = arith.constant 0 : i32
    return %arg0, %c0_i32 : i32, i32
  }
  func.func @transform_2(%arg0: i32) -> (i32, i32) {
    %c0_i32 = arith.constant 0 : i32
    %c0_i32_0 = arith.constant 0 : i32
    return %arg0, %c0_i32 : i32, i32
  }
  func.func @transform_3(%arg0: i32) -> (i32, i32) {
    %c0_i32 = arith.constant 0 : i32
    %c0_i32_0 = arith.constant 0 : i32
    %c0_i32_1 = arith.constant 0 : i32
    return %c0_i32, %c0_i32_0 : i32, i32
  }
  func.func @transform_4(%arg0: i32) -> (i32, i32) {
    %c0_i32 = arith.constant 0 : i32
    %c0_i32_0 = arith.constant 0 : i32
    %c0_i32_1 = arith.constant 0 : i32
    return %c0_i32, %c0_i32_0 : i32, i32
  }
  func.func @transform_5(%arg0: i32) -> (i32, i32) {
    %c0_i32 = arith.constant 0 : i32
    %c0_i32_0 = arith.constant 0 : i32
    %c0_i32_1 = arith.constant 0 : i32
    return %c0_i32, %c0_i32_0 : i32, i32
  }
  func.func @transform_6(%arg0: i32) -> (i32, i32) {
    %c0_i32 = arith.constant 0 : i32
    %c0_i32_0 = arith.constant 0 : i32
    %c0_i32_1 = arith.constant 0 : i32
    return %c0_i32, %c0_i32_0 : i32, i32
  }
  func.func @transform_7(%arg0: i32) -> (i32, i32) {
    %c0_i32 = arith.constant 0 : i32
    %c0_i32_0 = arith.constant 0 : i32
    %c0_i32_1 = arith.constant 0 : i32
    return %c0_i32, %c0_i32_0 : i32, i32
  }
  func.func @transform_8(%arg0: i32) -> (i32, i32) {
    %c0_i32 = arith.constant 0 : i32
    %c0_i32_0 = arith.constant 0 : i32
    %c0_i32_1 = arith.constant 0 : i32
    return %c0_i32, %c0_i32_0 : i32, i32
  }
  func.func @transform_9(%arg0: i32) -> (i32, i32) {
    %c0_i32 = arith.constant 0 : i32
    %c0_i32_0 = arith.constant 0 : i32
    %c0_i32_1 = arith.constant 0 : i32
    return %c0_i32, %c0_i32_0 : i32, i32
  }
  func.func @transform_10(%arg0: i32) -> (i32, i32) {
    %c0_i32 = arith.constant 0 : i32
    %c0_i32_0 = arith.constant 0 : i32
    %c0_i32_1 = arith.constant 0 : i32
    return %c0_i32, %c0_i32_0 : i32, i32
  }
  func.func @transform_11(%arg0: i32) -> (i32, i32) {
    %c0_i32 = arith.constant 0 : i32
    %c0_i32_0 = arith.constant 0 : i32
    %c0_i32_1 = arith.constant 0 : i32
    return %c0_i32, %c0_i32_0 : i32, i32
  }
  func.func @transform_12(%arg0: i32) -> (i32, i32) {
    %c0_i32 = arith.constant 0 : i32
    %c0_i32_0 = arith.constant 0 : i32
    return %arg0, %c0_i32 : i32, i32
  }
}

</mosaic_0001>

<llo_original>
// kernel: tpu_custom_call.1
$region0: #{tpu_custom_call.1}
  #allocation0 [shape = 'u32[]', space=smem, size = 0x4, offset = 0x4, fixed_abs, tag = 'smem constant byte address 0x4 - core index']
  #allocation1 [shape = 'u32[144,128]{1,0:T(1,128)}', space=vmem, size = 0x12000, scoped, tag = 'internal scratch']
  %s0 = inlined_call_operand.hbm [shape: f32[128,1024], index: 0, kind: input, shape index: {}]
  %s1 = inlined_call_operand.hbm [shape: f32[128,128], index: 1, kind: input, shape index: {}]
  %s2 = inlined_call_operand.hbm [shape: f32[128,128], index: 2, kind: input, shape index: {}]
  %s3 = inlined_call_operand.hbm [shape: f32[1024,128], index: 3, kind: input, shape index: {}]
  %s4 = inlined_call_operand.vmem [shape: f32[1,128], index: 4, kind: input, shape index: {}]
  %s5 = inlined_call_operand.hbm [shape: f32[128,256], index: 5, kind: input, shape index: {}]
  %s6 = inlined_call_operand.vmem [shape: f32[1,256], index: 6, kind: input, shape index: {}]
  %s7 = inlined_call_operand.hbm [shape: f32[128,128], index: 7, kind: input, shape index: {}]
  %s8 = inlined_call_operand.hbm [shape: f32[128,128], index: 8, kind: input, shape index: {}]
  %s9 = inlined_call_operand.vmem [shape: f32[1,128], index: 9, kind: input, shape index: {}]
  %s10 = inlined_call_operand.hbm [shape: f32[128,128], index: 10, kind: input, shape index: {}]
  %s11 = inlined_call_operand.vmem [shape: f32[1,128], index: 11, kind: input, shape index: {}]
  %s12 = inlined_call_operand.hbm [shape: f32[128,128], index: 12, kind: output, shape index: {}]
  %s13 = sld [smem:[#allocation0]]
  $region90: #{tpu_custom_call.1} parent=0
    _
  %s15 = ssub.s32 1, %s13
  %s16 = scalar_select 0, %s15, %s13
  $region1: #{tpu_custom_call.1} parent=0
    #allocation2 [shape = 'u8[524288]{0}', space=vmem, size = 0x80000, scoped, tag = 'input window, operand 0, single buffered']
    #allocation3 [shape = 's32[1]{0}', space=sflag, size = 0x4, scoped, tag = 'scoped memory for tpu_custom_call.1']
    #allocation4 [shape = 's32[1]{0}', space=sflag, size = 0x4, scoped, tag = 'scoped memory for tpu_custom_call.1']
    #allocation5 [shape = 'u8[65536]{0}', space=vmem, size = 0x10000, scoped, tag = 'input window, operand 1, single buffered']
    #allocation6 [shape = 's32[1]{0}', space=sflag, size = 0x4, scoped, tag = 'scoped memory for tpu_custom_call.1']
    #allocation7 [shape = 'u8[65536]{0}', space=vmem, size = 0x10000, scoped, tag = 'input window, operand 2, single buffered']
    #allocation8 [shape = 'u8[524288]{0}', space=vmem, size = 0x80000, scoped, tag = 'input window, operand 3, single buffered']
    #allocation9 [shape = 's32[1]{0}', space=sflag, size = 0x4, scoped, tag = 'scoped memory for tpu_custom_call.1']
    #allocation10 [shape = 'u8[131072]{0}', space=vmem, size = 0x20000, scoped, tag = 'input window, operand 5, single buffered']
    #allocation11 [shape = 'u8[65536]{0}', space=vmem, size = 0x10000, scoped, tag = 'input window, operand 7, single buffered']
    #allocation12 [shape = 's32[1]{0}', space=sflag, size = 0x4, scoped, tag = 'scoped memory for tpu_custom_call.1']
    #allocation13 [shape = 'u8[65536]{0}', space=vmem, size = 0x10000, scoped, tag = 'input window, operand 8, single buffered']
    #allocation14 [shape = 'u8[65536]{0}', space=vmem, size = 0x10000, scoped, tag = 'input window, operand 10, single buffered']
    #allocation15 [shape = 's32[1]{0}', space=sflag, size = 0x4, scoped, tag = 'scoped memory for tpu_custom_call.1']
    #allocation16 [shape = 'u8[65536]{0}', space=vmem, size = 0x10000, scoped, tag = 'output window, operand 0, single buffered']
    %17 = vsyncpa [#allocation3], 0
    %18 = vsyncpa [#allocation6], 0
    %19 = vsyncpa [#allocation9], 0
    %20 = vsyncpa [#allocation12], 0
    %21 = vsyncpa [#allocation15], 0
    %22 = vsyncpa [#allocation4], 0
    // Predicated region
    $region2: #{tpu_custom_call.1} parent=1 // pred_check
      _
    $region3: #{tpu_custom_call.1} parent=1 // pred_check_branch
      %24 = sbr.rel (0) target = $region5
    $region4: #{tpu_custom_call.1} parent=1 // pred_region
      %s26 = ssub.s32 16384, 16384
      %27 = vsyncadd [#allocation3], %s26
      %s28 = sshll.u32 [#allocation2], 4
      %s29 = int_to_ptr.vmem [resolvable:$true] %s28
      %34 = dma.hbm_to_vmem [thread:$0]  %s0, 16384, %s29, [#allocation3], 1024, 1024, 64
    $region5: #{tpu_custom_call.1} parent=1 // pred_fallthru
      _
    // Predicated region
    $region6: #{tpu_custom_call.1} parent=1 // pred_check
      _
    $region7: #{tpu_custom_call.1} parent=1 // pred_check_branch
      %36 = sbr.rel (0) target = $region9
    $region8: #{tpu_custom_call.1} parent=1 // pred_region
      %s38 = ssub.s32 2048, 2048
      %39 = vsyncadd [#allocation6], %s38
      %s40 = sshll.u32 [#allocation5], 4
      %s41 = int_to_ptr.vmem [resolvable:$true] %s40
      %46 = dma.hbm_to_vmem [thread:$0]  %s1, 2048, %s41, [#allocation6], 128, 128, 8
    $region9: #{tpu_custom_call.1} parent=1 // pred_fallthru
      _
    // Predicated region
    $region10: #{tpu_custom_call.1} parent=1 // pred_check
      _
    $region11: #{tpu_custom_call.1} parent=1 // pred_check_branch
      %48 = sbr.rel (0) target = $region13
    $region12: #{tpu_custom_call.1} parent=1 // pred_region
      %s50 = ssub.s32 2048, 2048
      %51 = vsyncadd [#allocation6], %s50
      %s52 = sshll.u32 [#allocation7], 4
      %s53 = int_to_ptr.vmem [resolvable:$true] %s52
      %58 = dma.hbm_to_vmem [thread:$0]  %s2, 2048, %s53, [#allocation6], 128, 128, 8
    $region13: #{tpu_custom_call.1} parent=1 // pred_fallthru
      _
    // Predicated region
    $region14: #{tpu_custom_call.1} parent=1 // pred_check
      _
    $region15: #{tpu_custom_call.1} parent=1 // pred_check_branch
      %60 = sbr.rel (0) target = $region17
    $region16: #{tpu_custom_call.1} parent=1 // pred_region
      %s62 = ssub.s32 16384, 16384
      %63 = vsyncadd [#allocation9], %s62
      %s64 = sshll.u32 [#allocation8], 4
      %s65 = int_to_ptr.vmem [resolvable:$true] %s64
      %70 = dma.hbm_to_vmem [thread:$0]  %s3, 16384, %s65, [#allocation9], 128, 128, 8
    $region17: #{tpu_custom_call.1} parent=1 // pred_fallthru
      _
    // Predicated region
    $region18: #{tpu_custom_call.1} parent=1 // pred_check
      _
    $region19: #{tpu_custom_call.1} parent=1 // pred_check_branch
      %72 = sbr.rel (0) target = $region21
    $region20: #{tpu_custom_call.1} parent=1 // pred_region
      _
    $region21: #{tpu_custom_call.1} parent=1 // pred_fallthru
      _
    // Predicated region
    $region22: #{tpu_custom_call.1} parent=1 // pred_check
      _
    $region23: #{tpu_custom_call.1} parent=1 // pred_check_branch
      %74 = sbr.rel (0) target = $region25
    $region24: #{tpu_custom_call.1} parent=1 // pred_region
      %s76 = ssub.s32 4096, 4096
      %77 = vsyncadd [#allocation9], %s76
      %s78 = sshll.u32 [#allocation10], 4
      %s79 = int_to_ptr.vmem [resolvable:$true] %s78
      %84 = dma.hbm_to_vmem [thread:$0]  %s5, 4096, %s79, [#allocation9], 256, 256, 16
    $region25: #{tpu_custom_call.1} parent=1 // pred_fallthru
      _
    // Predicated region
    $region26: #{tpu_custom_call.1} parent=1 // pred_check
      _
    $region27: #{tpu_custom_call.1} parent=1 // pred_check_branch
      %86 = sbr.rel (0) target = $region29
    $region28: #{tpu_custom_call.1} parent=1 // pred_region
      _
    $region29: #{tpu_custom_call.1} parent=1 // pred_fallthru
      _
    // Predicated region
    $region30: #{tpu_custom_call.1} parent=1 // pred_check
      _
    $region31: #{tpu_custom_call.1} parent=1 // pred_check_branch
      %88 = sbr.rel (0) target = $region33
    $region32: #{tpu_custom_call.1} parent=1 // pred_region
      %s90 = ssub.s32 2048, 2048
      %91 = vsyncadd [#allocation12], %s90
      %s92 = sshll.u32 [#allocation11], 4
      %s93 = int_to_ptr.vmem [resolvable:$true] %s92
      %98 = dma.hbm_to_vmem [thread:$0]  %s7, 2048, %s93, [#allocation12], 128, 128, 8
    $region33: #{tpu_custom_call.1} parent=1 // pred_fallthru
      _
    // Predicated region
    $region34: #{tpu_custom_call.1} parent=1 // pred_check
      _
    $region35: #{tpu_custom_call.1} parent=1 // pred_check_branch
      %100 = sbr.rel (0) target = $region37
    $region36: #{tpu_custom_call.1} parent=1 // pred_region
      %s102 = ssub.s32 2048, 2048
      %103 = vsyncadd [#allocation12], %s102
      %s104 = sshll.u32 [#allocation13], 4
      %s105 = int_to_ptr.vmem [resolvable:$true] %s104
      %110 = dma.hbm_to_vmem [thread:$0]  %s8, 2048, %s105, [#allocation12], 128, 128, 8
    $region37: #{tpu_custom_call.1} parent=1 // pred_fallthru
      _
    // Predicated region
    $region38: #{tpu_custom_call.1} parent=1 // pred_check
      _
    $region39: #{tpu_custom_call.1} parent=1 // pred_check_branch
      %112 = sbr.rel (0) target = $region41
    $region40: #{tpu_custom_call.1} parent=1 // pred_region
      _
    $region41: #{tpu_custom_call.1} parent=1 // pred_fallthru
      _
    // Predicated region
    $region42: #{tpu_custom_call.1} parent=1 // pred_check
      _
    $region43: #{tpu_custom_call.1} parent=1 // pred_check_branch
      %114 = sbr.rel (0) target = $region45
    $region44: #{tpu_custom_call.1} parent=1 // pred_region
      %s116 = ssub.s32 2048, 2048
      %117 = vsyncadd [#allocation15], %s116
      %s118 = sshll.u32 [#allocation14], 4
      %s119 = int_to_ptr.vmem [resolvable:$true] %s118
      %124 = dma.hbm_to_vmem [thread:$0]  %s10, 2048, %s119, [#allocation15], 128, 128, 8
    $region45: #{tpu_custom_call.1} parent=1 // pred_fallthru
      _
    // Predicated region
    $region46: #{tpu_custom_call.1} parent=1 // pred_check
      _
    $region47: #{tpu_custom_call.1} parent=1 // pred_check_branch
      %126 = sbr.rel (0) target = $region49
    $region48: #{tpu_custom_call.1} parent=1 // pred_region
      _
    $region49: #{tpu_custom_call.1} parent=1 // pred_fallthru
      _
    // Predicated region
    $region50: #{tpu_custom_call.1} parent=1 // pred_check
      _
    $region51: #{tpu_custom_call.1} parent=1 // pred_check_branch
      %128 = sbr.rel (0) target = $region53
    $region52: #{tpu_custom_call.1} parent=1 // pred_region
      %129 = dma.done [#allocation3], 16384
    $region53: #{tpu_custom_call.1} parent=1 // pred_fallthru
      _
    // Predicated region
    $region54: #{tpu_custom_call.1} parent=1 // pred_check
      _
    $region55: #{tpu_custom_call.1} parent=1 // pred_check_branch
      %131 = sbr.rel (0) target = $region57
    $region56: #{tpu_custom_call.1} parent=1 // pred_region
      %132 = dma.done [#allocation6], 2048
    $region57: #{tpu_custom_call.1} parent=1 // pred_fallthru
      _
    // Predicated region
    $region58: #{tpu_custom_call.1} parent=1 // pred_check
      _
    $region59: #{tpu_custom_call.1} parent=1 // pred_check_branch
      %134 = sbr.rel (0) target = $region61
    $region60: #{tpu_custom_call.1} parent=1 // pred_region
      %135 = dma.done [#allocation6], 2048
    $region61: #{tpu_custom_call.1} parent=1 // pred_fallthru
      _
    // Predicated region
    $region62: #{tpu_custom_call.1} parent=1 // pred_check
      _
    $region63: #{tpu_custom_call.1} parent=1 // pred_check_branch
      %137 = sbr.rel (0) target = $region65
    $region64: #{tpu_custom_call.1} parent=1 // pred_region
      %138 = dma.done [#allocation9], 16384
    $region65: #{tpu_custom_call.1} parent=1 // pred_fallthru
      _
    // Predicated region
    $region66: #{tpu_custom_call.1} parent=1 // pred_check
      _
    $region67: #{tpu_custom_call.1} parent=1 // pred_check_branch
      %140 = sbr.rel (0) target = $region69
    $region68: #{tpu_custom_call.1} parent=1 // pred_region
      %141 = dma.done [#allocation9], 4096
    $region69: #{tpu_custom_call.1} parent=1 // pred_fallthru
      _
    // Predicated region
    $region70: #{tpu_custom_call.1} parent=1 // pred_check
      _
    $region71: #{tpu_custom_call.1} parent=1 // pred_check_branch
      %143 = sbr.rel (0) target = $region73
    $region72: #{tpu_custom_call.1} parent=1 // pred_region
      %144 = dma.done [#allocation12], 2048
    $region73: #{tpu_custom_call.1} parent=1 // pred_fallthru
      _
    // Predicated region
    $region74: #{tpu_custom_call.1} parent=1 // pred_check
      _
    $region75: #{tpu_custom_call.1} parent=1 // pred_check_branch
      %146 = sbr.rel (0) target = $region77
    $region76: #{tpu_custom_call.1} parent=1 // pred_region
      %147 = dma.done [#allocation12], 2048
    $region77: #{tpu_custom_call.1} parent=1 // pred_fallthru
      _
    // Predicated region
    $region78: #{tpu_custom_call.1} parent=1 // pred_check
      _
    $region79: #{tpu_custom_call.1} parent=1 // pred_check_branch
      %149 = sbr.rel (0) target = $region81
    $region80: #{tpu_custom_call.1} parent=1 // pred_region
      %150 = dma.done [#allocation15], 2048
    $region81: #{tpu_custom_call.1} parent=1 // pred_fallthru
      _
    %v151 = vld [vmem:[%s4] sm:$0x1]
    %v152 = vld [vmem:[%s6] sm:$0x3]
    %v153 = vld [vmem:[%s9] sm:$0x1]
    %v154 = vld [vmem:[%s11] sm:$0x1]
    %v155 = vld [vmem:[#allocation2] sm:$0xff]
    %v156 = vld [vmem:[#allocation2 + $0x8] sm:$0xff]
    %v157 = vld [vmem:[#allocation2 + $0x10] sm:$0xff]
    %v158 = vld [vmem:[#allocation2 + $0x18] sm:$0xff]
    %v159 = vld [vmem:[#allocation2 + $0x20] sm:$0xff]
    %v160 = vld [vmem:[#allocation2 + $0x28] sm:$0xff]
    %v161 = vld [vmem:[#allocation2 + $0x30] sm:$0xff]
    %v162 = vld [vmem:[#allocation2 + $0x38] sm:$0xff]
    %v163 = vld [vmem:[#allocation2 + $0x40] sm:$0xff]
    %v164 = vld [vmem:[#allocation2 + $0x48] sm:$0xff]
    %v165 = vld [vmem:[#allocation2 + $0x50] sm:$0xff]
    %v166 = vld [vmem:[#allocation2 + $0x58] sm:$0xff]
    %v167 = vld [vmem:[#allocation2 + $0x60] sm:$0xff]
    %v168 = vld [vmem:[#allocation2 + $0x68] sm:$0xff]
    %v169 = vld [vmem:[#allocation2 + $0x70] sm:$0xff]
    %v170 = vld [vmem:[#allocation2 + $0x78] sm:$0xff]
    %v171 = vld [vmem:[#allocation2 + $0x80] sm:$0xff]
    %v172 = vld [vmem:[#allocation2 + $0x88] sm:$0xff]
    %v173 = vld [vmem:[#allocation2 + $0x90] sm:$0xff]
    %v174 = vld [vmem:[#allocation2 + $0x98] sm:$0xff]
    %v175 = vld [vmem:[#allocation2 + $0xa0] sm:$0xff]
    %v176 = vld [vmem:[#allocation2 + $0xa8] sm:$0xff]
    %v177 = vld [vmem:[#allocation2 + $0xb0] sm:$0xff]
    %v178 = vld [vmem:[#allocation2 + $0xb8] sm:$0xff]
    %v179 = vld [vmem:[#allocation2 + $0xc0] sm:$0xff]
    %v180 = vld [vmem:[#allocation2 + $0xc8] sm:$0xff]
    %v181 = vld [vmem:[#allocation2 + $0xd0] sm:$0xff]
    %v182 = vld [vmem:[#allocation2 + $0xd8] sm:$0xff]
    %v183 = vld [vmem:[#allocation2 + $0xe0] sm:$0xff]
    %v184 = vld [vmem:[#allocation2 + $0xe8] sm:$0xff]
    %v185 = vld [vmem:[#allocation2 + $0xf0] sm:$0xff]
    %v186 = vld [vmem:[#allocation2 + $0xf8] sm:$0xff]
    %v187 = vld [vmem:[#allocation2 + $0x100] sm:$0xff]
    %v188 = vld [vmem:[#allocation2 + $0x108] sm:$0xff]
    %v189 = vld [vmem:[#allocation2 + $0x110] sm:$0xff]
    %v190 = vld [vmem:[#allocation2 + $0x118] sm:$0xff]
    %v191 = vld [vmem:[#allocation2 + $0x120] sm:$0xff]
    %v192 = vld [vmem:[#allocation2 + $0x128] sm:$0xff]
    %v193 = vld [vmem:[#allocation2 + $0x130] sm:$0xff]
    %v194 = vld [vmem:[#allocation2 + $0x138] sm:$0xff]
    %v195 = vld [vmem:[#allocation2 + $0x140] sm:$0xff]
    %v196 = vld [vmem:[#allocation2 + $0x148] sm:$0xff]
    %v197 = vld [vmem:[#allocation2 + $0x150] sm:$0xff]
    %v198 = vld [vmem:[#allocation2 + $0x158] sm:$0xff]
    %v199 = vld [vmem:[#allocation2 + $0x160] sm:$0xff]
    %v200 = vld [vmem:[#allocation2 + $0x168] sm:$0xff]
    %v201 = vld [vmem:[#allocation2 + $0x170] sm:$0xff]
    %v202 = vld [vmem:[#allocation2 + $0x178] sm:$0xff]
    %v203 = vld [vmem:[#allocation2 + $0x180] sm:$0xff]
    %v204 = vld [vmem:[#allocation2 + $0x188] sm:$0xff]
    %v205 = vld [vmem:[#allocation2 + $0x190] sm:$0xff]
    %v206 = vld [vmem:[#allocation2 + $0x198] sm:$0xff]
    %v207 = vld [vmem:[#allocation2 + $0x1a0] sm:$0xff]
    %v208 = vld [vmem:[#allocation2 + $0x1a8] sm:$0xff]
    %v209 = vld [vmem:[#allocation2 + $0x1b0] sm:$0xff]
    %v210 = vld [vmem:[#allocation2 + $0x1b8] sm:$0xff]
    %v211 = vld [vmem:[#allocation2 + $0x1c0] sm:$0xff]
    %v212 = vld [vmem:[#allocation2 + $0x1c8] sm:$0xff]
    %v213 = vld [vmem:[#allocation2 + $0x1d0] sm:$0xff]
    %v214 = vld [vmem:[#allocation2 + $0x1d8] sm:$0xff]
    %v215 = vld [vmem:[#allocation2 + $0x1e0] sm:$0xff]
    %v216 = vld [vmem:[#allocation2 + $0x1e8] sm:$0xff]
    %v217 = vld [vmem:[#allocation2 + $0x1f0] sm:$0xff]
    %v218 = vld [vmem:[#allocation2 + $0x1f8] sm:$0xff]
    %v219 = vld [vmem:[#allocation2 + $0x200] sm:$0xff]
    %v220 = vld [vmem:[#allocation2 + $0x208] sm:$0xff]
    %v221 = vld [vmem:[#allocation2 + $0x210] sm:$0xff]
    %v222 = vld [vmem:[#allocation2 + $0x218] sm:$0xff]
    %v223 = vld [vmem:[#allocation2 + $0x220] sm:$0xff]
    %v224 = vld [vmem:[#allocation2 + $0x228] sm:$0xff]
    %v225 = vld [vmem:[#allocation2 + $0x230] sm:$0xff]
    %v226 = vld [vmem:[#allocation2 + $0x238] sm:$0xff]
    %v227 = vld [vmem:[#allocation2 + $0x240] sm:$0xff]
    %v228 = vld [vmem:[#allocation2 + $0x248] sm:$0xff]
    %v229 = vld [vmem:[#allocation2 + $0x250] sm:$0xff]
    %v230 = vld [vmem:[#allocation2 + $0x258] sm:$0xff]
    %v231 = vld [vmem:[#allocation2 + $0x260] sm:$0xff]
    %v232 = vld [vmem:[#allocation2 + $0x268] sm:$0xff]
    %v233 = vld [vmem:[#allocation2 + $0x270] sm:$0xff]
    %v234 = vld [vmem:[#allocation2 + $0x278] sm:$0xff]
    %v235 = vld [vmem:[#allocation2 + $0x280] sm:$0xff]
    %v236 = vld [vmem:[#allocation2 + $0x288] sm:$0xff]
    %v237 = vld [vmem:[#allocation2 + $0x290] sm:$0xff]
    %v238 = vld [vmem:[#allocation2 + $0x298] sm:$0xff]
    %v239 = vld [vmem:[#allocation2 + $0x2a0] sm:$0xff]
    %v240 = vld [vmem:[#allocation2 + $0x2a8] sm:$0xff]
    %v241 = vld [vmem:[#allocation2 + $0x2b0] sm:$0xff]
    %v242 = vld [vmem:[#allocation2 + $0x2b8] sm:$0xff]
    %v243 = vld [vmem:[#allocation2 + $0x2c0] sm:$0xff]
    %v244 = vld [vmem:[#allocation2 + $0x2c8] sm:$0xff]
    %v245 = vld [vmem:[#allocation2 + $0x2d0] sm:$0xff]
    %v246 = vld [vmem:[#allocation2 + $0x2d8] sm:$0xff]
    %v247 = vld [vmem:[#allocation2 + $0x2e0] sm:$0xff]
    %v248 = vld [vmem:[#allocation2 + $0x2e8] sm:$0xff]
    %v249 = vld [vmem:[#allocation2 + $0x2f0] sm:$0xff]
    %v250 = vld [vmem:[#allocation2 + $0x2f8] sm:$0xff]
    %v251 = vld [vmem:[#allocation2 + $0x300] sm:$0xff]
    %v252 = vld [vmem:[#allocation2 + $0x308] sm:$0xff]
    %v253 = vld [vmem:[#allocation2 + $0x310] sm:$0xff]
    %v254 = vld [vmem:[#allocation2 + $0x318] sm:$0xff]
    %v255 = vld [vmem:[#allocation2 + $0x320] sm:$0xff]
    %v256 = vld [vmem:[#allocation2 + $0x328] sm:$0xff]
    %v257 = vld [vmem:[#allocation2 + $0x330] sm:$0xff]
    %v258 = vld [vmem:[#allocation2 + $0x338] sm:$0xff]
    %v259 = vld [vmem:[#allocation2 + $0x340] sm:$0xff]
    %v260 = vld [vmem:[#allocation2 + $0x348] sm:$0xff]
    %v261 = vld [vmem:[#allocation2 + $0x350] sm:$0xff]
    %v262 = vld [vmem:[#allocation2 + $0x358] sm:$0xff]
    %v263 = vld [vmem:[#allocation2 + $0x360] sm:$0xff]
    %v264 = vld [vmem:[#allocation2 + $0x368] sm:$0xff]
    %v265 = vld [vmem:[#allocation2 + $0x370] sm:$0xff]
    %v266 = vld [vmem:[#allocation2 + $0x378] sm:$0xff]
    %v267 = vld [vmem:[#allocation2 + $0x380] sm:$0xff]
    %v268 = vld [vmem:[#allocation2 + $0x388] sm:$0xff]
    %v269 = vld [vmem:[#allocation2 + $0x390] sm:$0xff]
    %v270 = vld [vmem:[#allocation2 + $0x398] sm:$0xff]
    %v271 = vld [vmem:[#allocation2 + $0x3a0] sm:$0xff]
    %v272 = vld [vmem:[#allocation2 + $0x3a8] sm:$0xff]
    %v273 = vld [vmem:[#allocation2 + $0x3b0] sm:$0xff]
    %v274 = vld [vmem:[#allocation2 + $0x3b8] sm:$0xff]
    %v275 = vld [vmem:[#allocation2 + $0x3c0] sm:$0xff]
    %v276 = vld [vmem:[#allocation2 + $0x3c8] sm:$0xff]
    %v277 = vld [vmem:[#allocation2 + $0x3d0] sm:$0xff]
    %v278 = vld [vmem:[#allocation2 + $0x3d8] sm:$0xff]
    %v279 = vld [vmem:[#allocation2 + $0x3e0] sm:$0xff]
    %v280 = vld [vmem:[#allocation2 + $0x3e8] sm:$0xff]
    %v281 = vld [vmem:[#allocation2 + $0x3f0] sm:$0xff]
    %v282 = vld [vmem:[#allocation2 + $0x3f8] sm:$0xff]
    %v283 = vld [vmem:[#allocation8] sm:$0xff]
    %v284 = vld [vmem:[#allocation8 + $0x8] sm:$0xff]
    %v285 = vld [vmem:[#allocation8 + $0x10] sm:$0xff]
    %v286 = vld [vmem:[#allocation8 + $0x18] sm:$0xff]
    %v287 = vld [vmem:[#allocation8 + $0x20] sm:$0xff]
    %v288 = vld [vmem:[#allocation8 + $0x28] sm:$0xff]
    %v289 = vld [vmem:[#allocation8 + $0x30] sm:$0xff]
    %v290 = vld [vmem:[#allocation8 + $0x38] sm:$0xff]
    %v291 = vld [vmem:[#allocation8 + $0x40] sm:$0xff]
    %v292 = vld [vmem:[#allocation8 + $0x48] sm:$0xff]
    %v293 = vld [vmem:[#allocation8 + $0x50] sm:$0xff]
    %v294 = vld [vmem:[#allocation8 + $0x58] sm:$0xff]
    %v295 = vld [vmem:[#allocation8 + $0x60] sm:$0xff]
    %v296 = vld [vmem:[#allocation8 + $0x68] sm:$0xff]
    %v297 = vld [vmem:[#allocation8 + $0x70] sm:$0xff]
    %v298 = vld [vmem:[#allocation8 + $0x78] sm:$0xff]
    %v299 = vld [vmem:[#allocation8 + $0x80] sm:$0xff]
    %v300 = vld [vmem:[#allocation8 + $0x88] sm:$0xff]
    %v301 = vld [vmem:[#allocation8 + $0x90] sm:$0xff]
    %v302 = vld [vmem:[#allocation8 + $0x98] sm:$0xff]
    %v303 = vld [vmem:[#allocation8 + $0xa0] sm:$0xff]
    %v304 = vld [vmem:[#allocation8 + $0xa8] sm:$0xff]
    %v305 = vld [vmem:[#allocation8 + $0xb0] sm:$0xff]
    %v306 = vld [vmem:[#allocation8 + $0xb8] sm:$0xff]
    %v307 = vld [vmem:[#allocation8 + $0xc0] sm:$0xff]
    %v308 = vld [vmem:[#allocation8 + $0xc8] sm:$0xff]
    %v309 = vld [vmem:[#allocation8 + $0xd0] sm:$0xff]
    %v310 = vld [vmem:[#allocation8 + $0xd8] sm:$0xff]
    %v311 = vld [vmem:[#allocation8 + $0xe0] sm:$0xff]
    %v312 = vld [vmem:[#allocation8 + $0xe8] sm:$0xff]
    %v313 = vld [vmem:[#allocation8 + $0xf0] sm:$0xff]
    %v314 = vld [vmem:[#allocation8 + $0xf8] sm:$0xff]
    %v315 = vld [vmem:[#allocation8 + $0x100] sm:$0xff]
    %v316 = vld [vmem:[#allocation8 + $0x108] sm:$0xff]
    %v317 = vld [vmem:[#allocation8 + $0x110] sm:$0xff]
    %v318 = vld [vmem:[#allocation8 + $0x118] sm:$0xff]
    %v319 = vld [vmem:[#allocation8 + $0x120] sm:$0xff]
    %v320 = vld [vmem:[#allocation8 + $0x128] sm:$0xff]
    %v321 = vld [vmem:[#allocation8 + $0x130] sm:$0xff]
    %v322 = vld [vmem:[#allocation8 + $0x138] sm:$0xff]
    %v323 = vld [vmem:[#allocation8 + $0x140] sm:$0xff]
    %v324 = vld [vmem:[#allocation8 + $0x148] sm:$0xff]
    %v325 = vld [vmem:[#allocation8 + $0x150] sm:$0xff]
    %v326 = vld [vmem:[#allocation8 + $0x158] sm:$0xff]
    %v327 = vld [vmem:[#allocation8 + $0x160] sm:$0xff]
    %v328 = vld [vmem:[#allocation8 + $0x168] sm:$0xff]
    %v329 = vld [vmem:[#allocation8 + $0x170] sm:$0xff]
    %v330 = vld [vmem:[#allocation8 + $0x178] sm:$0xff]
    %v331 = vld [vmem:[#allocation8 + $0x180] sm:$0xff]
    %v332 = vld [vmem:[#allocation8 + $0x188] sm:$0xff]
    %v333 = vld [vmem:[#allocation8 + $0x190] sm:$0xff]
    %v334 = vld [vmem:[#allocation8 + $0x198] sm:$0xff]
    %v335 = vld [vmem:[#allocation8 + $0x1a0] sm:$0xff]
    %v336 = vld [vmem:[#allocation8 + $0x1a8] sm:$0xff]
    %v337 = vld [vmem:[#allocation8 + $0x1b0] sm:$0xff]
    %v338 = vld [vmem:[#allocation8 + $0x1b8] sm:$0xff]
    %v339 = vld [vmem:[#allocation8 + $0x1c0] sm:$0xff]
    %v340 = vld [vmem:[#allocation8 + $0x1c8] sm:$0xff]
    %v341 = vld [vmem:[#allocation8 + $0x1d0] sm:$0xff]
    %v342 = vld [vmem:[#allocation8 + $0x1d8] sm:$0xff]
    %v343 = vld [vmem:[#allocation8 + $0x1e0] sm:$0xff]
    %v344 = vld [vmem:[#allocation8 + $0x1e8] sm:$0xff]
    %v345 = vld [vmem:[#allocation8 + $0x1f0] sm:$0xff]
    %v346 = vld [vmem:[#allocation8 + $0x1f8] sm:$0xff]
    %v347 = vld [vmem:[#allocation8 + $0x200] sm:$0xff]
    %v348 = vld [vmem:[#allocation8 + $0x208] sm:$0xff]
    %v349 = vld [vmem:[#allocation8 + $0x210] sm:$0xff]
    %v350 = vld [vmem:[#allocation8 + $0x218] sm:$0xff]
    %v351 = vld [vmem:[#allocation8 + $0x220] sm:$0xff]
    %v352 = vld [vmem:[#allocation8 + $0x228] sm:$0xff]
    %v353 = vld [vmem:[#allocation8 + $0x230] sm:$0xff]
    %v354 = vld [vmem:[#allocation8 + $0x238] sm:$0xff]
    %v355 = vld [vmem:[#allocation8 + $0x240] sm:$0xff]
    %v356 = vld [vmem:[#allocation8 + $0x248] sm:$0xff]
    %v357 = vld [vmem:[#allocation8 + $0x250] sm:$0xff]
    %v358 = vld [vmem:[#allocation8 + $0x258] sm:$0xff]
    %v359 = vld [vmem:[#allocation8 + $0x260] sm:$0xff]
    %v360 = vld [vmem:[#allocation8 + $0x268] sm:$0xff]
    %v361 = vld [vmem:[#allocation8 + $0x270] sm:$0xff]
    %v362 = vld [vmem:[#allocation8 + $0x278] sm:$0xff]
    %v363 = vld [vmem:[#allocation8 + $0x280] sm:$0xff]
    %v364 = vld [vmem:[#allocation8 + $0x288] sm:$0xff]
    %v365 = vld [vmem:[#allocation8 + $0x290] sm:$0xff]
    %v366 = vld [vmem:[#allocation8 + $0x298] sm:$0xff]
    %v367 = vld [vmem:[#allocation8 + $0x2a0] sm:$0xff]
    %v368 = vld [vmem:[#allocation8 + $0x2a8] sm:$0xff]
    %v369 = vld [vmem:[#allocation8 + $0x2b0] sm:$0xff]
    %v370 = vld [vmem:[#allocation8 + $0x2b8] sm:$0xff]
    %v371 = vld [vmem:[#allocation8 + $0x2c0] sm:$0xff]
    %v372 = vld [vmem:[#allocation8 + $0x2c8] sm:$0xff]
    %v373 = vld [vmem:[#allocation8 + $0x2d0] sm:$0xff]
    %v374 = vld [vmem:[#allocation8 + $0x2d8] sm:$0xff]
    %v375 = vld [vmem:[#allocation8 + $0x2e0] sm:$0xff]
    %v376 = vld [vmem:[#allocation8 + $0x2e8] sm:$0xff]
    %v377 = vld [vmem:[#allocation8 + $0x2f0] sm:$0xff]
    %v378 = vld [vmem:[#allocation8 + $0x2f8] sm:$0xff]
    %v379 = vld [vmem:[#allocation8 + $0x300] sm:$0xff]
    %v380 = vld [vmem:[#allocation8 + $0x308] sm:$0xff]
    %v381 = vld [vmem:[#allocation8 + $0x310] sm:$0xff]
    %v382 = vld [vmem:[#allocation8 + $0x318] sm:$0xff]
    %v383 = vld [vmem:[#allocation8 + $0x320] sm:$0xff]
    %v384 = vld [vmem:[#allocation8 + $0x328] sm:$0xff]
    %v385 = vld [vmem:[#allocation8 + $0x330] sm:$0xff]
    %v386 = vld [vmem:[#allocation8 + $0x338] sm:$0xff]
    %v387 = vld [vmem:[#allocation8 + $0x340] sm:$0xff]
    %v388 = vld [vmem:[#allocation8 + $0x348] sm:$0xff]
    %v389 = vld [vmem:[#allocation8 + $0x350] sm:$0xff]
    %v390 = vld [vmem:[#allocation8 + $0x358] sm:$0xff]
    %v391 = vld [vmem:[#allocation8 + $0x360] sm:$0xff]
    %v392 = vld [vmem:[#allocation8 + $0x368] sm:$0xff]
    %v393 = vld [vmem:[#allocation8 + $0x370] sm:$0xff]
    %v394 = vld [vmem:[#allocation8 + $0x378] sm:$0xff]
    %v395 = vld [vmem:[#allocation8 + $0x380] sm:$0xff]
    %v396 = vld [vmem:[#allocation8 + $0x388] sm:$0xff]
    %v397 = vld [vmem:[#allocation8 + $0x390] sm:$0xff]
    %v398 = vld [vmem:[#allocation8 + $0x398] sm:$0xff]
    %v399 = vld [vmem:[#allocation8 + $0x3a0] sm:$0xff]
    %v400 = vld [vmem:[#allocation8 + $0x3a8] sm:$0xff]
    %v401 = vld [vmem:[#allocation8 + $0x3b0] sm:$0xff]
    %v402 = vld [vmem:[#allocation8 + $0x3b8] sm:$0xff]
    %v403 = vld [vmem:[#allocation8 + $0x3c0] sm:$0xff]
    %v404 = vld [vmem:[#allocation8 + $0x3c8] sm:$0xff]
    %v405 = vld [vmem:[#allocation8 + $0x3d0] sm:$0xff]
    %v406 = vld [vmem:[#allocation8 + $0x3d8] sm:$0xff]
    %v407 = vld [vmem:[#allocation8 + $0x3e0] sm:$0xff]
    %v408 = vld [vmem:[#allocation8 + $0x3e8] sm:$0xff]
    %v409 = vld [vmem:[#allocation8 + $0x3f0] sm:$0xff]
    %v410 = vld [vmem:[#allocation8 + $0x3f8] sm:$0xff]
    %v412 = vlaneseq
    %v413 = vshrl.u32 %v412, 7
    %v414 = vsub.s32 0, %v413
    %v415 = vrot.slane %v151, %v414
    %417 = vmatprep.subr.mxu0 0.0
    %418 = vmatpush1.msra.mxu0 %v283
    %419 = vmatprep.subr.mxu0 0.0
    %420 = vmatpush1.msra.mxu0 %v284
    %421 = vmatprep.subr.mxu0 0.0
    %422 = vmatpush1.msra.mxu0 %v285
    %423 = vmatprep.subr.mxu0 0.0
    %424 = vmatpush1.msra.mxu0 %v286
    %425 = vmatprep.subr.mxu0 0.0
    %426 = vmatpush1.msra.mxu0 %v287
    %427 = vmatprep.subr.mxu0 0.0
    %428 = vmatpush1.msra.mxu0 %v288
    %429 = vmatprep.subr.mxu0 0.0
    %430 = vmatpush1.msra.mxu0 %v289
    %431 = vmatprep.subr.mxu0 0.0
    %432 = vmatpush1.msra.mxu0 %v290
    %433 = vmatprep.subr.mxu0 0.0
    %434 = vmatpush1.msra.mxu0 %v291
    %435 = vmatprep.subr.mxu0 0.0
    %436 = vmatpush1.msra.mxu0 %v292
    %437 = vmatprep.subr.mxu0 0.0
    %438 = vmatpush1.msra.mxu0 %v293
    %439 = vmatprep.subr.mxu0 0.0
    %440 = vmatpush1.msra.mxu0 %v294
    %441 = vmatprep.subr.mxu0 0.0
    %442 = vmatpush1.msra.mxu0 %v295
    %443 = vmatprep.subr.mxu0 0.0
    %444 = vmatpush1.msra.mxu0 %v296
    %445 = vmatprep.subr.mxu0 0.0
    %446 = vmatpush1.msra.mxu0 %v297
    %447 = vmatprep.subr.mxu0 0.0
    %448 = vmatpush1.msra.mxu0 %v298
    %449 = vmatprep.subr.mxu0 0.0
    %450 = vmatpush1.msra.mxu0 %v299
    %451 = vmatprep.subr.mxu0 0.0
    %452 = vmatpush1.msra.mxu0 %v300
    %453 = vmatprep.subr.mxu0 0.0
    %454 = vmatpush1.msra.mxu0 %v301
    %455 = vmatprep.subr.mxu0 0.0
    %456 = vmatpush1.msra.mxu0 %v302
    %457 = vmatprep.subr.mxu0 0.0
    %458 = vmatpush1.msra.mxu0 %v303
    %459 = vmatprep.subr.mxu0 0.0
    %460 = vmatpush1.msra.mxu0 %v304
    %461 = vmatprep.subr.mxu0 0.0
    %462 = vmatpush1.msra.mxu0 %v305
    %463 = vmatprep.subr.mxu0 0.0
    %464 = vmatpush1.msra.mxu0 %v306
    %465 = vmatprep.subr.mxu0 0.0
    %466 = vmatpush1.msra.mxu0 %v307
    %467 = vmatprep.subr.mxu0 0.0
    %468 = vmatpush1.msra.mxu0 %v308
    %469 = vmatprep.subr.mxu0 0.0
    %470 = vmatpush1.msra.mxu0 %v309
    %471 = vmatprep.subr.mxu0 0.0
    %472 = vmatpush1.msra.mxu0 %v310
    %473 = vmatprep.subr.mxu0 0.0
    %474 = vmatpush1.msra.mxu0 %v311
    %475 = vmatprep.subr.mxu0 0.0
    %476 = vmatpush1.msra.mxu0 %v312
    %477 = vmatprep.subr.mxu0 0.0
    %478 = vmatpush1.msra.mxu0 %v313
    %479 = vmatprep.subr.mxu0 0.0
    %480 = vmatpush1.msra.mxu0 %v314
    %481 = vmatprep.mubr.f32.mxu0 %v156
    %482 = vmatmul.mubr.f32.gmra.mrb[0].mxu0 %v155
    %v483 = vpop.f32.mrb[0].mxu0
    %v484 = vadd.f32 %v415, %v483
    %v485 = vpop.f32.mrb[0].mxu0
    %486 = vmatprep.mubr.f32.mxu0 %v164
    %487 = vmatmul.mubr.f32.gmra.mrb[0].mxu0 %v163
    %v488 = vpop.f32.mrb[0].mxu0
    %v489 = vadd.f32 %v415, %v488
    %v490 = vpop.f32.mrb[0].mxu0
    %491 = vmatprep.mubr.f32.mxu0 %v172
    %492 = vmatmul.mubr.f32.gmra.mrb[0].mxu0 %v171
    %v493 = vpop.f32.mrb[0].mxu0
    %v494 = vadd.f32 %v415, %v493
    %v495 = vpop.f32.mrb[0].mxu0
    %496 = vmatprep.mubr.f32.mxu0 %v180
    %497 = vmatmul.mubr.f32.gmra.mrb[0].mxu0 %v179
    %v498 = vpop.f32.mrb[0].mxu0
    %v499 = vadd.f32 %v415, %v498
    %v500 = vpop.f32.mrb[0].mxu0
    %501 = vmatprep.mubr.f32.mxu0 %v188
    %502 = vmatmul.mubr.f32.gmra.mrb[0].mxu0 %v187
    %v503 = vpop.f32.mrb[0].mxu0
    %v504 = vadd.f32 %v415, %v503
    %v505 = vpop.f32.mrb[0].mxu0
    %506 = vmatprep.mubr.f32.mxu0 %v196
    %507 = vmatmul.mubr.f32.gmra.mrb[0].mxu0 %v195
    %v508 = vpop.f32.mrb[0].mxu0
    %v509 = vadd.f32 %v415, %v508
    %v510 = vpop.f32.mrb[0].mxu0
    %511 = vmatprep.mubr.f32.mxu0 %v204
    %512 = vmatmul.mubr.f32.gmra.mrb[0].mxu0 %v203
    %v513 = vpop.f32.mrb[0].mxu0
    %v514 = vadd.f32 %v415, %v513
    %v515 = vpop.f32.mrb[0].mxu0
    %516 = vmatprep.mubr.f32.mxu0 %v212
    %517 = vmatmul.mubr.f32.gmra.mrb[0].mxu0 %v211
    %v518 = vpop.f32.mrb[0].mxu0
    %v519 = vadd.f32 %v415, %v518
    %v520 = vpop.f32.mrb[0].mxu0
    %521 = vmatprep.mubr.f32.mxu0 %v220
    %522 = vmatmul.mubr.f32.gmra.mrb[0].mxu0 %v219
    %v523 = vpop.f32.mrb[0].mxu0
    %v524 = vadd.f32 %v415, %v523
    %v525 = vpop.f32.mrb[0].mxu0
    %526 = vmatprep.mubr.f32.mxu0 %v228
    %527 = vmatmul.mubr.f32.gmra.mrb[0].mxu0 %v227
    %v528 = vpop.f32.mrb[0].mxu0
    %v529 = vadd.f32 %v415, %v528
    %v530 = vpop.f32.mrb[0].mxu0
    %531 = vmatprep.mubr.f32.mxu0 %v236
    %532 = vmatmul.mubr.f32.gmra.mrb[0].mxu0 %v235
    %v533 = vpop.f32.mrb[0].mxu0
    %v534 = vadd.f32 %v415, %v533
    %v535 = vpop.f32.mrb[0].mxu0
    %536 = vmatprep.mubr.f32.mxu0 %v244
    %537 = vmatmul.mubr.f32.gmra.mrb[0].mxu0 %v243
    %v538 = vpop.f32.mrb[0].mxu0
    %v539 = vadd.f32 %v415, %v538
    %v540 = vpop.f32.mrb[0].mxu0
    %541 = vmatprep.mubr.f32.mxu0 %v252
    %542 = vmatmul.mubr.f32.gmra.mrb[0].mxu0 %v251
    %v543 = vpop.f32.mrb[0].mxu0
    %v544 = vadd.f32 %v415, %v543
    %v545 = vpop.f32.mrb[0].mxu0
    %546 = vmatprep.mubr.f32.mxu0 %v260
    %547 = vmatmul.mubr.f32.gmra.mrb[0].mxu0 %v259
    %v548 = vpop.f32.mrb[0].mxu0
    %v549 = vadd.f32 %v415, %v548
    %v550 = vpop.f32.mrb[0].mxu0
    %551 = vmatprep.mubr.f32.mxu0 %v268
    %552 = vmatmul.mubr.f32.gmra.mrb[0].mxu0 %v267
    %v553 = vpop.f32.mrb[0].mxu0
    %v554 = vadd.f32 %v415, %v553
    %v555 = vpop.f32.mrb[0].mxu0
    %556 = vmatprep.mubr.f32.mxu0 %v276
    %557 = vmatmul.mubr.f32.gmra.mrb[0].mxu0 %v275
    %v558 = vpop.f32.mrb[0].mxu0
    %v559 = vadd.f32 %v415, %v558
    %v560 = vpop.f32.mrb[0].mxu0
    %561 = vdwg.mxu0
    %562 = vmatprep.subr.mxu0 0.0
    %563 = vmatpush1.msra.mxu0 %v315
    %564 = vmatprep.subr.mxu0 0.0
    %565 = vmatpush1.msra.mxu0 %v316
    %566 = vmatprep.subr.mxu0 0.0
    %567 = vmatpush1.msra.mxu0 %v317
    %568 = vmatprep.subr.mxu0 0.0
    %569 = vmatpush1.msra.mxu0 %v318
    %570 = vmatprep.subr.mxu0 0.0
    %571 = vmatpush1.msra.mxu0 %v319
    %572 = vmatprep.subr.mxu0 0.0
    %573 = vmatpush1.msra.mxu0 %v320
    %574 = vmatprep.subr.mxu0 0.0
    %575 = vmatpush1.msra.mxu0 %v321
    %576 = vmatprep.subr.mxu0 0.0
    %577 = vmatpush1.msra.mxu0 %v322
    %578 = vmatprep.subr.mxu0 0.0
    %579 = vmatpush1.msra.mxu0 %v323
    %580 = vmatprep.subr.mxu0 0.0
    %581 = vmatpush1.msra.mxu0 %v324
    %582 = vmatprep.subr.mxu0 0.0
    %583 = vmatpush1.msra.mxu0 %v325
    %584 = vmatprep.subr.mxu0 0.0
    %585 = vmatpush1.msra.mxu0 %v326
    %586 = vmatprep.subr.mxu0 0.0
    %587 = vmatpush1.msra.mxu0 %v327
    %588 = vmatprep.subr.mxu0 0.0
    %589 = vmatpush1.msra.mxu0 %v328
    %590 = vmatprep.subr.mxu0 0.0
    %591 = vmatpush1.msra.mxu0 %v329
    %592 = vmatprep.subr.mxu0 0.0
    %593 = vmatpush1.msra.mxu0 %v330
    %594 = vmatprep.subr.mxu0 0.0
    %595 = vmatpush1.msra.mxu0 %v331
    %596 = vmatprep.subr.mxu0 0.0
    %597 = vmatpush1.msra.mxu0 %v332
    %598 = vmatprep.subr.mxu0 0.0
    %599 = vmatpush1.msra.mxu0 %v333
    %600 = vmatprep.subr.mxu0 0.0
    %601 = vmatpush1.msra.mxu0 %v334
    %602 = vmatprep.subr.mxu0 0.0
    %603 = vmatpush1.msra.mxu0 %v335
    %604 = vmatprep.subr.mxu0 0.0
    %605 = vmatpush1.msra.mxu0 %v336
    %606 = vmatprep.subr.mxu0 0.0
    %607 = vmatpush1.msra.mxu0 %v337
    %608 = vmatprep.subr.mxu0 0.0
    %609 = vmatpush1.msra.mxu0 %v338
    %610 = vmatprep.subr.mxu0 0.0
    %611 = vmatpush1.msra.mxu0 %v339
    %612 = vmatprep.subr.mxu0 0.0
    %613 = vmatpush1.msra.mxu0 %v340
    %614 = vmatprep.subr.mxu0 0.0
    %615 = vmatpush1.msra.mxu0 %v341
    %616 = vmatprep.subr.mxu0 0.0
    %617 = vmatpush1.msra.mxu0 %v342
    %618 = vmatprep.subr.mxu0 0.0
    %619 = vmatpush1.msra.mxu0 %v343
    %620 = vmatprep.subr.mxu0 0.0
    %621 = vmatpush1.msra.mxu0 %v344
    %622 = vmatprep.subr.mxu0 0.0
    %623 = vmatpush1.msra.mxu0 %v345
    %624 = vmatprep.subr.mxu0 0.0
    %625 = vmatpush1.msra.mxu0 %v346
    %626 = vmatprep.mubr.f32.mxu0 %v158
    %627 = vmatmul.mubr.f32.gmra.mrb[0].mxu0 %v157
    %v628 = vpop.f32.mrb[0].mxu0
    %v629 = vadd.f32 %v484, %v628
    %v630 = vpop.f32.mrb[0].mxu0
    %631 = vmatprep.mubr.f32.mxu0 %v166
    %632 = vmatmul.mubr.f32.gmra.mrb[0].mxu0 %v165
    %v633 = vpop.f32.mrb[0].mxu0
    %v634 = vadd.f32 %v489, %v633
    %v635 = vpop.f32.mrb[0].mxu0
    %636 = vmatprep.mubr.f32.mxu0 %v174
    %637 = vmatmul.mubr.f32.gmra.mrb[0].mxu0 %v173
    %v638 = vpop.f32.mrb[0].mxu0
    %v639 = vadd.f32 %v494, %v638
    %v640 = vpop.f32.mrb[0].mxu0
    %641 = vmatprep.mubr.f32.mxu0 %v182
    %642 = vmatmul.mubr.f32.gmra.mrb[0].mxu0 %v181
    %v643 = vpop.f32.mrb[0].mxu0
    %v644 = vadd.f32 %v499, %v643
    %v645 = vpop.f32.mrb[0].mxu0
    %646 = vmatprep.mubr.f32.mxu0 %v190
    %647 = vmatmul.mubr.f32.gmra.mrb[0].mxu0 %v189
    %v648 = vpop.f32.mrb[0].mxu0
    %v649 = vadd.f32 %v504, %v648
    %v650 = vpop.f32.mrb[0].mxu0
    %651 = vmatprep.mubr.f32.mxu0 %v198
    %652 = vmatmul.mubr.f32.gmra.mrb[0].mxu0 %v197
    %v653 = vpop.f32.mrb[0].mxu0
    %v654 = vadd.f32 %v509, %v653
    %v655 = vpop.f32.mrb[0].mxu0
    %656 = vmatprep.mubr.f32.mxu0 %v206
    %657 = vmatmul.mubr.f32.gmra.mrb[0].mxu0 %v205
    %v658 = vpop.f32.mrb[0].mxu0
    %v659 = vadd.f32 %v514, %v658
    %v660 = vpop.f32.mrb[0].mxu0
    %661 = vmatprep.mubr.f32.mxu0 %v214
    %662 = vmatmul.mubr.f32.gmra.mrb[0].mxu0 %v213
    %v663 = vpop.f32.mrb[0].mxu0
    %v664 = vadd.f32 %v519, %v663
    %v665 = vpop.f32.mrb[0].mxu0
    %666 = vmatprep.mubr.f32.mxu0 %v222
    %667 = vmatmul.mubr.f32.gmra.mrb[0].mxu0 %v221
    %v668 = vpop.f32.mrb[0].mxu0
    %v669 = vadd.f32 %v524, %v668
    %v670 = vpop.f32.mrb[0].mxu0
    %671 = vmatprep.mubr.f32.mxu0 %v230
    %672 = vmatmul.mubr.f32.gmra.mrb[0].mxu0 %v229
    %v673 = vpop.f32.mrb[0].mxu0
    %v674 = vadd.f32 %v529, %v673
    %v675 = vpop.f32.mrb[0].mxu0
    %676 = vmatprep.mubr.f32.mxu0 %v238
    %677 = vmatmul.mubr.f32.gmra.mrb[0].mxu0 %v237
    %v678 = vpop.f32.mrb[0].mxu0
    %v679 = vadd.f32 %v534, %v678
    %v680 = vpop.f32.mrb[0].mxu0
    %681 = vmatprep.mubr.f32.mxu0 %v246
    %682 = vmatmul.mubr.f32.gmra.mrb[0].mxu0 %v245
    %v683 = vpop.f32.mrb[0].mxu0
    %v684 = vadd.f32 %v539, %v683
    %v685 = vpop.f32.mrb[0].mxu0
    %686 = vmatprep.mubr.f32.mxu0 %v254
    %687 = vmatmul.mubr.f32.gmra.mrb[0].mxu0 %v253
    %v688 = vpop.f32.mrb[0].mxu0
    %v689 = vadd.f32 %v544, %v688
    %v690 = vpop.f32.mrb[0].mxu0
    %691 = vmatprep.mubr.f32.mxu0 %v262
    %692 = vmatmul.mubr.f32.gmra.mrb[0].mxu0 %v261
    %v693 = vpop.f32.mrb[0].mxu0
    %v694 = vadd.f32 %v549, %v693
    %v695 = vpop.f32.mrb[0].mxu0
    %696 = vmatprep.mubr.f32.mxu0 %v270
    %697 = vmatmul.mubr.f32.gmra.mrb[0].mxu0 %v269
    %v698 = vpop.f32.mrb[0].mxu0
    %v699 = vadd.f32 %v554, %v698
    %v700 = vpop.f32.mrb[0].mxu0
    %701 = vmatprep.mubr.f32.mxu0 %v278
    %702 = vmatmul.mubr.f32.gmra.mrb[0].mxu0 %v277
    %v703 = vpop.f32.mrb[0].mxu0
    %v704 = vadd.f32 %v559, %v703
    %v705 = vpop.f32.mrb[0].mxu0
    %706 = vdwg.mxu0
    %707 = vmatprep.subr.mxu0 0.0
    %708 = vmatpush1.msra.mxu0 %v347
    %709 = vmatprep.subr.mxu0 0.0
    %710 = vmatpush1.msra.mxu0 %v348
    %711 = vmatprep.subr.mxu0 0.0
    %712 = vmatpush1.msra.mxu0 %v349
    %713 = vmatprep.subr.mxu0 0.0
    %714 = vmatpush1.msra.mxu0 %v350
    %715 = vmatprep.subr.mxu0 0.0
    %716 = vmatpush1.msra.mxu0 %v351
    %717 = vmatprep.subr.mxu0 0.0
    %718 = vmatpush1.msra.mxu0 %v352
    %719 = vmatprep.subr.mxu0 0.0
    %720 = vmatpush1.msra.mxu0 %v353
    %721 = vmatprep.subr.mxu0 0.0
    %722 = vmatpush1.msra.mxu0 %v354
    %723 = vmatprep.subr.mxu0 0.0
    %724 = vmatpush1.msra.mxu0 %v355
    %725 = vmatprep.subr.mxu0 0.0
    %726 = vmatpush1.msra.mxu0 %v356
    %727 = vmatprep.subr.mxu0 0.0
    %728 = vmatpush1.msra.mxu0 %v357
    %729 = vmatprep.subr.mxu0 0.0
    %730 = vmatpush1.msra.mxu0 %v358
    %731 = vmatprep.subr.mxu0 0.0
    %732 = vmatpush1.msra.mxu0 %v359
    %733 = vmatprep.subr.mxu0 0.0
    %734 = vmatpush1.msra.mxu0 %v360
    %735 = vmatprep.subr.mxu0 0.0
    %736 = vmatpush1.msra.mxu0 %v361
    %737 = vmatprep.subr.mxu0 0.0
    %738 = vmatpush1.msra.mxu0 %v362
    %739 = vmatprep.subr.mxu0 0.0
    %740 = vmatpush1.msra.mxu0 %v363
    %741 = vmatprep.subr.mxu0 0.0
    %742 = vmatpush1.msra.mxu0 %v364
    %743 = vmatprep.subr.mxu0 0.0
    %744 = vmatpush1.msra.mxu0 %v365
    %745 = vmatprep.subr.mxu0 0.0
    %746 = vmatpush1.msra.mxu0 %v366
    %747 = vmatprep.subr.mxu0 0.0
    %748 = vmatpush1.msra.mxu0 %v367
    %749 = vmatprep.subr.mxu0 0.0
    %750 = vmatpush1.msra.mxu0 %v368
    %751 = vmatprep.subr.mxu0 0.0
    %752 = vmatpush1.msra.mxu0 %v369
    %753 = vmatprep.subr.mxu0 0.0
    %754 = vmatpush1.msra.mxu0 %v370
    %755 = vmatprep.subr.mxu0 0.0
    %756 = vmatpush1.msra.mxu0 %v371
    %757 = vmatprep.subr.mxu0 0.0
    %758 = vmatpush1.msra.mxu0 %v372
    %759 = vmatprep.subr.mxu0 0.0
    %760 = vmatpush1.msra.mxu0 %v373
    %761 = vmatprep.subr.mxu0 0.0
    %762 = vmatpush1.msra.mxu0 %v374
    %763 = vmatprep.subr.mxu0 0.0
    %764 = vmatpush1.msra.mxu0 %v375
    %765 = vmatprep.subr.mxu0 0.0
    %766 = vmatpush1.msra.mxu0 %v376
    %767 = vmatprep.subr.mxu0 0.0
    %768 = vmatpush1.msra.mxu0 %v377
    %769 = vmatprep.subr.mxu0 0.0
    %770 = vmatpush1.msra.mxu0 %v378
    %771 = vmatprep.mubr.f32.mxu0 %v160
    %772 = vmatmul.mubr.f32.gmra.mrb[0].mxu0 %v159
    %v773 = vpop.f32.mrb[0].mxu0
    %v774 = vadd.f32 %v629, %v773
    %v775 = vpop.f32.mrb[0].mxu0
    %776 = vmatprep.mubr.f32.mxu0 %v168
    %777 = vmatmul.mubr.f32.gmra.mrb[0].mxu0 %v167
    %v778 = vpop.f32.mrb[0].mxu0
    %v779 = vadd.f32 %v634, %v778
    %v780 = vpop.f32.mrb[0].mxu0
    %781 = vmatprep.mubr.f32.mxu0 %v176
    %782 = vmatmul.mubr.f32.gmra.mrb[0].mxu0 %v175
    %v783 = vpop.f32.mrb[0].mxu0
    %v784 = vadd.f32 %v639, %v783
    %v785 = vpop.f32.mrb[0].mxu0
    %786 = vmatprep.mubr.f32.mxu0 %v184
    %787 = vmatmul.mubr.f32.gmra.mrb[0].mxu0 %v183
    %v788 = vpop.f32.mrb[0].mxu0
    %v789 = vadd.f32 %v644, %v788
    %v790 = vpop.f32.mrb[0].mxu0
    %791 = vmatprep.mubr.f32.mxu0 %v192
    %792 = vmatmul.mubr.f32.gmra.mrb[0].mxu0 %v191
    %v793 = vpop.f32.mrb[0].mxu0
    %v794 = vadd.f32 %v649, %v793
    %v795 = vpop.f32.mrb[0].mxu0
    %796 = vmatprep.mubr.f32.mxu0 %v200
    %797 = vmatmul.mubr.f32.gmra.mrb[0].mxu0 %v199
    %v798 = vpop.f32.mrb[0].mxu0
    %v799 = vadd.f32 %v654, %v798
    %v800 = vpop.f32.mrb[0].mxu0
    %801 = vmatprep.mubr.f32.mxu0 %v208
    %802 = vmatmul.mubr.f32.gmra.mrb[0].mxu0 %v207
    %v803 = vpop.f32.mrb[0].mxu0
    %v804 = vadd.f32 %v659, %v803
    %v805 = vpop.f32.mrb[0].mxu0
    %806 = vmatprep.mubr.f32.mxu0 %v216
    %807 = vmatmul.mubr.f32.gmra.mrb[0].mxu0 %v215
    %v808 = vpop.f32.mrb[0].mxu0
    %v809 = vadd.f32 %v664, %v808
    %v810 = vpop.f32.mrb[0].mxu0
    %811 = vmatprep.mubr.f32.mxu0 %v224
    %812 = vmatmul.mubr.f32.gmra.mrb[0].mxu0 %v223
    %v813 = vpop.f32.mrb[0].mxu0
    %v814 = vadd.f32 %v669, %v813
    %v815 = vpop.f32.mrb[0].mxu0
    %816 = vmatprep.mubr.f32.mxu0 %v232
    %817 = vmatmul.mubr.f32.gmra.mrb[0].mxu0 %v231
    %v818 = vpop.f32.mrb[0].mxu0
    %v819 = vadd.f32 %v674, %v818
    %v820 = vpop.f32.mrb[0].mxu0
    %821 = vmatprep.mubr.f32.mxu0 %v240
    %822 = vmatmul.mubr.f32.gmra.mrb[0].mxu0 %v239
    %v823 = vpop.f32.mrb[0].mxu0
    %v824 = vadd.f32 %v679, %v823
    %v825 = vpop.f32.mrb[0].mxu0
    %826 = vmatprep.mubr.f32.mxu0 %v248
    %827 = vmatmul.mubr.f32.gmra.mrb[0].mxu0 %v247
    %v828 = vpop.f32.mrb[0].mxu0
    %v829 = vadd.f32 %v684, %v828
    %v830 = vpop.f32.mrb[0].mxu0
    %831 = vmatprep.mubr.f32.mxu0 %v256
    %832 = vmatmul.mubr.f32.gmra.mrb[0].mxu0 %v255
    %v833 = vpop.f32.mrb[0].mxu0
    %v834 = vadd.f32 %v689, %v833
    %v835 = vpop.f32.mrb[0].mxu0
    %836 = vmatprep.mubr.f32.mxu0 %v264
    %837 = vmatmul.mubr.f32.gmra.mrb[0].mxu0 %v263
    %v838 = vpop.f32.mrb[0].mxu0
    %v839 = vadd.f32 %v694, %v838
    %v840 = vpop.f32.mrb[0].mxu0
    %841 = vmatprep.mubr.f32.mxu0 %v272
    %842 = vmatmul.mubr.f32.gmra.mrb[0].mxu0 %v271
    %v843 = vpop.f32.mrb[0].mxu0
    %v844 = vadd.f32 %v699, %v843
    %v845 = vpop.f32.mrb[0].mxu0
    %846 = vmatprep.mubr.f32.mxu0 %v280
    %847 = vmatmul.mubr.f32.gmra.mrb[0].mxu0 %v279
    %v848 = vpop.f32.mrb[0].mxu0
    %v849 = vadd.f32 %v704, %v848
    %v850 = vpop.f32.mrb[0].mxu0
    %851 = vdwg.mxu0
    %852 = vmatprep.subr.mxu0 0.0
    %853 = vmatpush1.msra.mxu0 %v379
    %854 = vmatprep.subr.mxu0 0.0
    %855 = vmatpush1.msra.mxu0 %v380
    %856 = vmatprep.subr.mxu0 0.0
    %857 = vmatpush1.msra.mxu0 %v381
    %858 = vmatprep.subr.mxu0 0.0
    %859 = vmatpush1.msra.mxu0 %v382
    %860 = vmatprep.subr.mxu0 0.0
    %861 = vmatpush1.msra.mxu0 %v383
    %862 = vmatprep.subr.mxu0 0.0
    %863 = vmatpush1.msra.mxu0 %v384
    %864 = vmatprep.subr.mxu0 0.0
    %865 = vmatpush1.msra.mxu0 %v385
    %866 = vmatprep.subr.mxu0 0.0
    %867 = vmatpush1.msra.mxu0 %v386
    %868 = vmatprep.subr.mxu0 0.0
    %869 = vmatpush1.msra.mxu0 %v387
    %870 = vmatprep.subr.mxu0 0.0
    %871 = vmatpush1.msra.mxu0 %v388
    %872 = vmatprep.subr.mxu0 0.0
    %873 = vmatpush1.msra.mxu0 %v389
    %874 = vmatprep.subr.mxu0 0.0
    %875 = vmatpush1.msra.mxu0 %v390
    %876 = vmatprep.subr.mxu0 0.0
    %877 = vmatpush1.msra.mxu0 %v391
    %878 = vmatprep.subr.mxu0 0.0
    %879 = vmatpush1.msra.mxu0 %v392
    %880 = vmatprep.subr.mxu0 0.0
    %881 = vmatpush1.msra.mxu0 %v393
    %882 = vmatprep.subr.mxu0 0.0
    %883 = vmatpush1.msra.mxu0 %v394
    %884 = vmatprep.subr.mxu0 0.0
    %885 = vmatpush1.msra.mxu0 %v395
    %886 = vmatprep.subr.mxu0 0.0
    %887 = vmatpush1.msra.mxu0 %v396
    %888 = vmatprep.subr.mxu0 0.0
    %889 = vmatpush1.msra.mxu0 %v397
    %890 = vmatprep.subr.mxu0 0.0
    %891 = vmatpush1.msra.mxu0 %v398
    %892 = vmatprep.subr.mxu0 0.0
    %893 = vmatpush1.msra.mxu0 %v399
    %894 = vmatprep.subr.mxu0 0.0
    %895 = vmatpush1.msra.mxu0 %v400
    %896 = vmatprep.subr.mxu0 0.0
    %897 = vmatpush1.msra.mxu0 %v401
    %898 = vmatprep.subr.mxu0 0.0
    %899 = vmatpush1.msra.mxu0 %v402
    %900 = vmatprep.subr.mxu0 0.0
    %901 = vmatpush1.msra.mxu0 %v403
    %902 = vmatprep.subr.mxu0 0.0
    %903 = vmatpush1.msra.mxu0 %v404
    %904 = vmatprep.subr.mxu0 0.0
    %905 = vmatpush1.msra.mxu0 %v405
    %906 = vmatprep.subr.mxu0 0.0
    %907 = vmatpush1.msra.mxu0 %v406
    %908 = vmatprep.subr.mxu0 0.0
    %909 = vmatpush1.msra.mxu0 %v407
    %910 = vmatprep.subr.mxu0 0.0
    %911 = vmatpush1.msra.mxu0 %v408
    %912 = vmatprep.subr.mxu0 0.0
    %913 = vmatpush1.msra.mxu0 %v409
    %914 = vmatprep.subr.mxu0 0.0
    %915 = vmatpush1.msra.mxu0 %v410
    %916 = vmatprep.mubr.f32.mxu0 %v162
    %917 = vmatmul.mubr.f32.gmra.mrb[0].mxu0 %v161
    %v918 = vpop.f32.mrb[0].mxu0
    %v919 = vadd.f32 %v774, %v918
    %v920 = vpop.f32.mrb[0].mxu0
    %921 = vmatprep.mubr.f32.mxu0 %v170
    %922 = vmatmul.mubr.f32.gmra.mrb[0].mxu0 %v169
    %v923 = vpop.f32.mrb[0].mxu0
    %v924 = vadd.f32 %v779, %v923
    %v925 = vpop.f32.mrb[0].mxu0
    %926 = vmatprep.mubr.f32.mxu0 %v178
    %927 = vmatmul.mubr.f32.gmra.mrb[0].mxu0 %v177
    %v928 = vpop.f32.mrb[0].mxu0
    %v929 = vadd.f32 %v784, %v928
    %v930 = vpop.f32.mrb[0].mxu0
    %931 = vmatprep.mubr.f32.mxu0 %v186
    %932 = vmatmul.mubr.f32.gmra.mrb[0].mxu0 %v185
    %v933 = vpop.f32.mrb[0].mxu0
    %v934 = vadd.f32 %v789, %v933
    %v935 = vpop.f32.mrb[0].mxu0
    %936 = vmatprep.mubr.f32.mxu0 %v194
    %937 = vmatmul.mubr.f32.gmra.mrb[0].mxu0 %v193
    %v938 = vpop.f32.mrb[0].mxu0
    %v939 = vadd.f32 %v794, %v938
    %v940 = vpop.f32.mrb[0].mxu0
    %941 = vmatprep.mubr.f32.mxu0 %v202
    %942 = vmatmul.mubr.f32.gmra.mrb[0].mxu0 %v201
    %v943 = vpop.f32.mrb[0].mxu0
    %v944 = vadd.f32 %v799, %v943
    %v945 = vpop.f32.mrb[0].mxu0
    %946 = vmatprep.mubr.f32.mxu0 %v210
    %947 = vmatmul.mubr.f32.gmra.mrb[0].mxu0 %v209
    %v948 = vpop.f32.mrb[0].mxu0
    %v949 = vadd.f32 %v804, %v948
    %v950 = vpop.f32.mrb[0].mxu0
    %951 = vmatprep.mubr.f32.mxu0 %v218
    %952 = vmatmul.mubr.f32.gmra.mrb[0].mxu0 %v217
    %v953 = vpop.f32.mrb[0].mxu0
    %v954 = vadd.f32 %v809, %v953
    %v955 = vpop.f32.mrb[0].mxu0
    %956 = vmatprep.mubr.f32.mxu0 %v226
    %957 = vmatmul.mubr.f32.gmra.mrb[0].mxu0 %v225
    %v958 = vpop.f32.mrb[0].mxu0
    %v959 = vadd.f32 %v814, %v958
    %v960 = vpop.f32.mrb[0].mxu0
    %961 = vmatprep.mubr.f32.mxu0 %v234
    %962 = vmatmul.mubr.f32.gmra.mrb[0].mxu0 %v233
    %v963 = vpop.f32.mrb[0].mxu0
    %v964 = vadd.f32 %v819, %v963
    %v965 = vpop.f32.mrb[0].mxu0
    %966 = vmatprep.mubr.f32.mxu0 %v242
    %967 = vmatmul.mubr.f32.gmra.mrb[0].mxu0 %v241
    %v968 = vpop.f32.mrb[0].mxu0
    %v969 = vadd.f32 %v824, %v968
    %v970 = vpop.f32.mrb[0].mxu0
    %971 = vmatprep.mubr.f32.mxu0 %v250
    %972 = vmatmul.mubr.f32.gmra.mrb[0].mxu0 %v249
    %v973 = vpop.f32.mrb[0].mxu0
    %v974 = vadd.f32 %v829, %v973
    %v975 = vpop.f32.mrb[0].mxu0
    %976 = vmatprep.mubr.f32.mxu0 %v258
    %977 = vmatmul.mubr.f32.gmra.mrb[0].mxu0 %v257
    %v978 = vpop.f32.mrb[0].mxu0
    %v979 = vadd.f32 %v834, %v978
    %v980 = vpop.f32.mrb[0].mxu0
    %981 = vmatprep.mubr.f32.mxu0 %v266
    %982 = vmatmul.mubr.f32.gmra.mrb[0].mxu0 %v265
    %v983 = vpop.f32.mrb[0].mxu0
    %v984 = vadd.f32 %v839, %v983
    %v985 = vpop.f32.mrb[0].mxu0
    %986 = vmatprep.mubr.f32.mxu0 %v274
    %987 = vmatmul.mubr.f32.gmra.mrb[0].mxu0 %v273
    %v988 = vpop.f32.mrb[0].mxu0
    %v989 = vadd.f32 %v844, %v988
    %v990 = vpop.f32.mrb[0].mxu0
    %991 = vmatprep.mubr.f32.mxu0 %v282
    %992 = vmatmul.mubr.f32.gmra.mrb[0].mxu0 %v281
    %v993 = vpop.f32.mrb[0].mxu0
    %v994 = vadd.f32 %v849, %v993
    %v995 = vpop.f32.mrb[0].mxu0
    %996 = vdwg.mxu0
    %v997 = vmax.f32 %v919, 0.0
    %v998 = vmax.f32 %v924, 0.0
    %v999 = vmax.f32 %v929, 0.0
    %v1000 = vmax.f32 %v934, 0.0
    %v1001 = vmax.f32 %v939, 0.0
    %v1002 = vmax.f32 %v944, 0.0
    %v1003 = vmax.f32 %v949, 0.0
    %v1004 = vmax.f32 %v954, 0.0
    %v1005 = vmax.f32 %v959, 0.0
    %v1006 = vmax.f32 %v964, 0.0
    %v1007 = vmax.f32 %v969, 0.0
    %v1008 = vmax.f32 %v974, 0.0
    %v1009 = vmax.f32 %v979, 0.0
    %v1010 = vmax.f32 %v984, 0.0
    %v1011 = vmax.f32 %v989, 0.0
    %v1012 = vmax.f32 %v994, 0.0
    %v1013 = vld [vmem:[#allocation10] sm:$0xff]
    %v1014 = vld [vmem:[#allocation10 + $0x8] sm:$0xff]
    %v1015 = vld [vmem:[#allocation10 + $0x10] sm:$0xff]
    %v1016 = vld [vmem:[#allocation10 + $0x18] sm:$0xff]
    %v1017 = vld [vmem:[#allocation10 + $0x20] sm:$0xff]
    %v1018 = vld [vmem:[#allocation10 + $0x28] sm:$0xff]
    %v1019 = vld [vmem:[#allocation10 + $0x30] sm:$0xff]
    %v1020 = vld [vmem:[#allocation10 + $0x38] sm:$0xff]
    %v1021 = vld [vmem:[#allocation10 + $0x40] sm:$0xff]
    %v1022 = vld [vmem:[#allocation10 + $0x48] sm:$0xff]
    %v1023 = vld [vmem:[#allocation10 + $0x50] sm:$0xff]
    %v1024 = vld [vmem:[#allocation10 + $0x58] sm:$0xff]
    %v1025 = vld [vmem:[#allocation10 + $0x60] sm:$0xff]
    %v1026 = vld [vmem:[#allocation10 + $0x68] sm:$0xff]
    %v1027 = vld [vmem:[#allocation10 + $0x70] sm:$0xff]
    %v1028 = vld [vmem:[#allocation10 + $0x78] sm:$0xff]
    %v1029 = vld [vmem:[#allocation10 + $0x80] sm:$0xff]
    %v1030 = vld [vmem:[#allocation10 + $0x88] sm:$0xff]
    %v1031 = vld [vmem:[#allocation10 + $0x90] sm:$0xff]
    %v1032 = vld [vmem:[#allocation10 + $0x98] sm:$0xff]
    %v1033 = vld [vmem:[#allocation10 + $0xa0] sm:$0xff]
    %v1034 = vld [vmem:[#allocation10 + $0xa8] sm:$0xff]
    %v1035 = vld [vmem:[#allocation10 + $0xb0] sm:$0xff]
    %v1036 = vld [vmem:[#allocation10 + $0xb8] sm:$0xff]
    %v1037 = vld [vmem:[#allocation10 + $0xc0] sm:$0xff]
    %v1038 = vld [vmem:[#allocation10 + $0xc8] sm:$0xff]
    %v1039 = vld [vmem:[#allocation10 + $0xd0] sm:$0xff]
    %v1040 = vld [vmem:[#allocation10 + $0xd8] sm:$0xff]
    %v1041 = vld [vmem:[#allocation10 + $0xe0] sm:$0xff]
    %v1042 = vld [vmem:[#allocation10 + $0xe8] sm:$0xff]
    %v1043 = vld [vmem:[#allocation10 + $0xf0] sm:$0xff]
    %v1044 = vld [vmem:[#allocation10 + $0xf8] sm:$0xff]
    %v1046 = vlaneseq
    %v1047 = vshrl.u32 %v1046, 7
    %v1048 = vsub.s32 0, %v1047
    %v1049 = vrot.slane %v152, %v1048
    %v1050 = vlaneseq
    %v1051 = vshrl.u32 %v1050, 7
    %v1052 = vsub.s32 1, %v1051
    %v1053 = vrot.slane %v152, %v1052
    %1056 = vmatprep.subr.mxu0 %v1014
    %1057 = vmatpush1.msra.mxu0 %v1013
    %1058 = vmatprep.subr.mxu0 %v1016
    %1059 = vmatpush1.msra.mxu0 %v1015
    %1060 = vmatprep.subr.mxu0 %v1018
    %1061 = vmatpush1.msra.mxu0 %v1017
    %1062 = vmatprep.subr.mxu0 %v1020
    %1063 = vmatpush1.msra.mxu0 %v1019
    %1064 = vmatprep.subr.mxu0 %v1022
    %1065 = vmatpush1.msra.mxu0 %v1021
    %1066 = vmatprep.subr.mxu0 %v1024
    %1067 = vmatpush1.msra.mxu0 %v1023
    %1068 = vmatprep.subr.mxu0 %v1026
    %1069 = vmatpush1.msra.mxu0 %v1025
    %1070 = vmatprep.subr.mxu0 %v1028
    %1071 = vmatpush1.msra.mxu0 %v1027
    %1072 = vmatprep.subr.mxu0 %v1030
    %1073 = vmatpush1.msra.mxu0 %v1029
    %1074 = vmatprep.subr.mxu0 %v1032
    %1075 = vmatpush1.msra.mxu0 %v1031
    %1076 = vmatprep.subr.mxu0 %v1034
    %1077 = vmatpush1.msra.mxu0 %v1033
    %1078 = vmatprep.subr.mxu0 %v1036
    %1079 = vmatpush1.msra.mxu0 %v1035
    %1080 = vmatprep.subr.mxu0 %v1038
    %1081 = vmatpush1.msra.mxu0 %v1037
    %1082 = vmatprep.subr.mxu0 %v1040
    %1083 = vmatpush1.msra.mxu0 %v1039
    %1084 = vmatprep.subr.mxu0 %v1042
    %1085 = vmatpush1.msra.mxu0 %v1041
    %1086 = vmatprep.subr.mxu0 %v1044
    %1087 = vmatpush1.msra.mxu0 %v1043
    %1088 = vmatprep.subr.mxu0 0.0
    %1089 = vmatpush1.msra.mxu0 0.0
    %1090 = vmatprep.subr.mxu0 0.0
    %1091 = vmatpush1.msra.mxu0 0.0
    %1092 = vmatprep.subr.mxu0 0.0
    %1093 = vmatpush1.msra.mxu0 0.0
    %1094 = vmatprep.subr.mxu0 0.0
    %1095 = vmatpush1.msra.mxu0 0.0
    %1096 = vmatprep.subr.mxu0 0.0
    %1097 = vmatpush1.msra.mxu0 0.0
    %1098 = vmatprep.subr.mxu0 0.0
    %1099 = vmatpush1.msra.mxu0 0.0
    %1100 = vmatprep.subr.mxu0 0.0
    %1101 = vmatpush1.msra.mxu0 0.0
    %1102 = vmatprep.subr.mxu0 0.0
    %1103 = vmatpush1.msra.mxu0 0.0
    %1104 = vmatprep.subr.mxu0 0.0
    %1105 = vmatpush1.msra.mxu0 0.0
    %1106 = vmatprep.subr.mxu0 0.0
    %1107 = vmatpush1.msra.mxu0 0.0
    %1108 = vmatprep.subr.mxu0 0.0
    %1109 = vmatpush1.msra.mxu0 0.0
    %1110 = vmatprep.subr.mxu0 0.0
    %1111 = vmatpush1.msra.mxu0 0.0
    %1112 = vmatprep.subr.mxu0 0.0
    %1113 = vmatpush1.msra.mxu0 0.0
    %1114 = vmatprep.subr.mxu0 0.0
    %1115 = vmatpush1.msra.mxu0 0.0
    %1116 = vmatprep.subr.mxu0 0.0
    %1117 = vmatpush1.msra.mxu0 0.0
    %1118 = vmatprep.subr.mxu0 0.0
    %1119 = vmatpush1.msra.mxu0 0.0
    %1120 = vmatprep.mubr.f32.mxu0 0.0
    %1121 = vmatmul.mubr.f32.gmra.mrb[0].mxu0 %v997
    %v1122 = vpop.f32.mrb[0].mxu0
    %v1123 = vadd.f32 %v1049, %v1122
    %v1124 = vpop.f32.mrb[0].mxu0
    %v1125 = vadd.f32 %v1053, %v1124
    %1126 = vmatprep.mubr.f32.mxu0 0.0
    %1127 = vmatmul.mubr.f32.gmra.mrb[0].mxu0 %v998
    %v1128 = vpop.f32.mrb[0].mxu0
    %v1129 = vadd.f32 %v1049, %v1128
    %v1130 = vpop.f32.mrb[0].mxu0
    %v1131 = vadd.f32 %v1053, %v1130
    %1132 = vmatprep.mubr.f32.mxu0 0.0
    %1133 = vmatmul.mubr.f32.gmra.mrb[0].mxu0 %v999
    %v1134 = vpop.f32.mrb[0].mxu0
    %v1135 = vadd.f32 %v1049, %v1134
    %v1136 = vpop.f32.mrb[0].mxu0
    %v1137 = vadd.f32 %v1053, %v1136
    %1138 = vmatprep.mubr.f32.mxu0 0.0
    %1139 = vmatmul.mubr.f32.gmra.mrb[0].mxu0 %v1000
    %v1140 = vpop.f32.mrb[0].mxu0
    %v1141 = vadd.f32 %v1049, %v1140
    %v1142 = vpop.f32.mrb[0].mxu0
    %v1143 = vadd.f32 %v1053, %v1142
    %1144 = vmatprep.mubr.f32.mxu0 0.0
    %1145 = vmatmul.mubr.f32.gmra.mrb[0].mxu0 %v1001
    %v1146 = vpop.f32.mrb[0].mxu0
    %v1147 = vadd.f32 %v1049, %v1146
    %v1148 = vpop.f32.mrb[0].mxu0
    %v1149 = vadd.f32 %v1053, %v1148
    %1150 = vmatprep.mubr.f32.mxu0 0.0
    %1151 = vmatmul.mubr.f32.gmra.mrb[0].mxu0 %v1002
    %v1152 = vpop.f32.mrb[0].mxu0
    %v1153 = vadd.f32 %v1049, %v1152
    %v1154 = vpop.f32.mrb[0].mxu0
    %v1155 = vadd.f32 %v1053, %v1154
    %1156 = vmatprep.mubr.f32.mxu0 0.0
    %1157 = vmatmul.mubr.f32.gmra.mrb[0].mxu0 %v1003
    %v1158 = vpop.f32.mrb[0].mxu0
    %v1159 = vadd.f32 %v1049, %v1158
    %v1160 = vpop.f32.mrb[0].mxu0
    %v1161 = vadd.f32 %v1053, %v1160
    %1162 = vmatprep.mubr.f32.mxu0 0.0
    %1163 = vmatmul.mubr.f32.gmra.mrb[0].mxu0 %v1004
    %v1164 = vpop.f32.mrb[0].mxu0
    %v1165 = vadd.f32 %v1049, %v1164
    %v1166 = vpop.f32.mrb[0].mxu0
    %v1167 = vadd.f32 %v1053, %v1166
    %1168 = vmatprep.mubr.f32.mxu0 0.0
    %1169 = vmatmul.mubr.f32.gmra.mrb[0].mxu0 %v1005
    %v1170 = vpop.f32.mrb[0].mxu0
    %v1171 = vadd.f32 %v1049, %v1170
    %v1172 = vpop.f32.mrb[0].mxu0
    %v1173 = vadd.f32 %v1053, %v1172
    %1174 = vmatprep.mubr.f32.mxu0 0.0
    %1175 = vmatmul.mubr.f32.gmra.mrb[0].mxu0 %v1006
    %v1176 = vpop.f32.mrb[0].mxu0
    %v1177 = vadd.f32 %v1049, %v1176
    %v1178 = vpop.f32.mrb[0].mxu0
    %v1179 = vadd.f32 %v1053, %v1178
    %1180 = vmatprep.mubr.f32.mxu0 0.0
    %1181 = vmatmul.mubr.f32.gmra.mrb[0].mxu0 %v1007
    %v1182 = vpop.f32.mrb[0].mxu0
    %v1183 = vadd.f32 %v1049, %v1182
    %v1184 = vpop.f32.mrb[0].mxu0
    %v1185 = vadd.f32 %v1053, %v1184
    %1186 = vmatprep.mubr.f32.mxu0 0.0
    %1187 = vmatmul.mubr.f32.gmra.mrb[0].mxu0 %v1008
    %v1188 = vpop.f32.mrb[0].mxu0
    %v1189 = vadd.f32 %v1049, %v1188
    %v1190 = vpop.f32.mrb[0].mxu0
    %v1191 = vadd.f32 %v1053, %v1190
    %1192 = vmatprep.mubr.f32.mxu0 0.0
    %1193 = vmatmul.mubr.f32.gmra.mrb[0].mxu0 %v1009
    %v1194 = vpop.f32.mrb[0].mxu0
    %v1195 = vadd.f32 %v1049, %v1194
    %v1196 = vpop.f32.mrb[0].mxu0
    %v1197 = vadd.f32 %v1053, %v1196
    %1198 = vmatprep.mubr.f32.mxu0 0.0
    %1199 = vmatmul.mubr.f32.gmra.mrb[0].mxu0 %v1010
    %v1200 = vpop.f32.mrb[0].mxu0
    %v1201 = vadd.f32 %v1049, %v1200
    %v1202 = vpop.f32.mrb[0].mxu0
    %v1203 = vadd.f32 %v1053, %v1202
    %1204 = vmatprep.mubr.f32.mxu0 0.0
    %1205 = vmatmul.mubr.f32.gmra.mrb[0].mxu0 %v1011
    %v1206 = vpop.f32.mrb[0].mxu0
    %v1207 = vadd.f32 %v1049, %v1206
    %v1208 = vpop.f32.mrb[0].mxu0
    %v1209 = vadd.f32 %v1053, %v1208
    %1210 = vmatprep.mubr.f32.mxu0 0.0
    %1211 = vmatmul.mubr.f32.gmra.mrb[0].mxu0 %v1012
    %v1212 = vpop.f32.mrb[0].mxu0
    %v1213 = vadd.f32 %v1049, %v1212
    %v1214 = vpop.f32.mrb[0].mxu0
    %v1215 = vadd.f32 %v1053, %v1214
    %1216 = vdwg.mxu0
    %v1217 = vmul.f32 %v1125, 0.5
    %v1218 = vmul.f32 %v1131, 0.5
    %v1219 = vmul.f32 %v1137, 0.5
    %v1220 = vmul.f32 %v1143, 0.5
    %v1221 = vmul.f32 %v1149, 0.5
    %v1222 = vmul.f32 %v1155, 0.5
    %v1223 = vmul.f32 %v1161, 0.5
    %v1224 = vmul.f32 %v1167, 0.5
    %v1225 = vmul.f32 %v1173, 0.5
    %v1226 = vmul.f32 %v1179, 0.5
    %v1227 = vmul.f32 %v1185, 0.5
    %v1228 = vmul.f32 %v1191, 0.5
    %v1229 = vmul.f32 %v1197, 0.5
    %v1230 = vmul.f32 %v1203, 0.5
    %v1231 = vmul.f32 %v1209, 0.5
    %v1232 = vmul.f32 %v1215, 0.5
    %v1233 = vmul.f32 %v1217, 1.442695
    %v1234 = vpow.pop %v1233
    %v1235 = vmul.f32 %v1218, 1.442695
    %v1236 = vpow.pop %v1235
    %v1237 = vmul.f32 %v1219, 1.442695
    %v1238 = vpow.pop %v1237
    %v1239 = vmul.f32 %v1220, 1.442695
    %v1240 = vpow.pop %v1239
    %v1241 = vmul.f32 %v1221, 1.442695
    %v1242 = vpow.pop %v1241
    %v1243 = vmul.f32 %v1222, 1.442695
    %v1244 = vpow.pop %v1243
    %v1245 = vmul.f32 %v1223, 1.442695
    %v1246 = vpow.pop %v1245
    %v1247 = vmul.f32 %v1224, 1.442695
    %v1248 = vpow.pop %v1247
    %v1249 = vmul.f32 %v1225, 1.442695
    %v1250 = vpow.pop %v1249
    %v1251 = vmul.f32 %v1226, 1.442695
    %v1252 = vpow.pop %v1251
    %v1253 = vmul.f32 %v1227, 1.442695
    %v1254 = vpow.pop %v1253
    %v1255 = vmul.f32 %v1228, 1.442695
    %v1256 = vpow.pop %v1255
    %v1257 = vmul.f32 %v1229, 1.442695
    %v1258 = vpow.pop %v1257
    %v1259 = vmul.f32 %v1230, 1.442695
    %v1260 = vpow.pop %v1259
    %v1261 = vmul.f32 %v1231, 1.442695
    %v1262 = vpow.pop %v1261
    %v1263 = vmul.f32 %v1232, 1.442695
    %v1264 = vpow.pop %v1263
    %v1265 = vld [vmem:[#allocation5] sm:$0xff]
    %v1266 = vld [vmem:[#allocation5 + $0x8] sm:$0xff]
    %v1267 = vld [vmem:[#allocation5 + $0x10] sm:$0xff]
    %v1268 = vld [vmem:[#allocation5 + $0x18] sm:$0xff]
    %v1269 = vld [vmem:[#allocation5 + $0x20] sm:$0xff]
    %v1270 = vld [vmem:[#allocation5 + $0x28] sm:$0xff]
    %v1271 = vld [vmem:[#allocation5 + $0x30] sm:$0xff]
    %v1272 = vld [vmem:[#allocation5 + $0x38] sm:$0xff]
    %v1273 = vld [vmem:[#allocation5 + $0x40] sm:$0xff]
    %v1274 = vld [vmem:[#allocation5 + $0x48] sm:$0xff]
    %v1275 = vld [vmem:[#allocation5 + $0x50] sm:$0xff]
    %v1276 = vld [vmem:[#allocation5 + $0x58] sm:$0xff]
    %v1277 = vld [vmem:[#allocation5 + $0x60] sm:$0xff]
    %v1278 = vld [vmem:[#allocation5 + $0x68] sm:$0xff]
    %v1279 = vld [vmem:[#allocation5 + $0x70] sm:$0xff]
    %v1280 = vld [vmem:[#allocation5 + $0x78] sm:$0xff]
    %v1281 = vmul.f32 %v1234, %v1265
    %v1282 = vmul.f32 %v1236, %v1266
    %v1283 = vmul.f32 %v1238, %v1267
    %v1284 = vmul.f32 %v1240, %v1268
    %v1285 = vmul.f32 %v1242, %v1269
    %v1286 = vmul.f32 %v1244, %v1270
    %v1287 = vmul.f32 %v1246, %v1271
    %v1288 = vmul.f32 %v1248, %v1272
    %v1289 = vmul.f32 %v1250, %v1273
    %v1290 = vmul.f32 %v1252, %v1274
    %v1291 = vmul.f32 %v1254, %v1275
    %v1292 = vmul.f32 %v1256, %v1276
    %v1293 = vmul.f32 %v1258, %v1277
    %v1294 = vmul.f32 %v1260, %v1278
    %v1295 = vmul.f32 %v1262, %v1279
    %v1296 = vmul.f32 %v1264, %v1280
    %v1297 = vadd.f32 %v1123, %v1281
    %v1298 = vadd.f32 %v1129, %v1282
    %v1299 = vadd.f32 %v1135, %v1283
    %v1300 = vadd.f32 %v1141, %v1284
    %v1301 = vadd.f32 %v1147, %v1285
    %v1302 = vadd.f32 %v1153, %v1286
    %v1303 = vadd.f32 %v1159, %v1287
    %v1304 = vadd.f32 %v1165, %v1288
    %v1305 = vadd.f32 %v1171, %v1289
    %v1306 = vadd.f32 %v1177, %v1290
    %v1307 = vadd.f32 %v1183, %v1291
    %v1308 = vadd.f32 %v1189, %v1292
    %v1309 = vadd.f32 %v1195, %v1293
    %v1310 = vadd.f32 %v1201, %v1294
    %v1311 = vadd.f32 %v1207, %v1295
    %v1312 = vadd.f32 %v1213, %v1296
    %v1313 = vld [vmem:[#allocation7] sm:$0xff]
    %v1314 = vld [vmem:[#allocation7 + $0x8] sm:$0xff]
    %v1315 = vld [vmem:[#allocation7 + $0x10] sm:$0xff]
    %v1316 = vld [vmem:[#allocation7 + $0x18] sm:$0xff]
    %v1317 = vld [vmem:[#allocation7 + $0x20] sm:$0xff]
    %v1318 = vld [vmem:[#allocation7 + $0x28] sm:$0xff]
    %v1319 = vld [vmem:[#allocation7 + $0x30] sm:$0xff]
    %v1320 = vld [vmem:[#allocation7 + $0x38] sm:$0xff]
    %v1321 = vld [vmem:[#allocation7 + $0x40] sm:$0xff]
    %v1322 = vld [vmem:[#allocation7 + $0x48] sm:$0xff]
    %v1323 = vld [vmem:[#allocation7 + $0x50] sm:$0xff]
    %v1324 = vld [vmem:[#allocation7 + $0x58] sm:$0xff]
    %v1325 = vld [vmem:[#allocation7 + $0x60] sm:$0xff]
    %v1326 = vld [vmem:[#allocation7 + $0x68] sm:$0xff]
    %v1327 = vld [vmem:[#allocation7 + $0x70] sm:$0xff]
    %v1328 = vld [vmem:[#allocation7 + $0x78] sm:$0xff]
    %v1329 = vld [vmem:[#allocation11] sm:$0xff]
    %v1330 = vld [vmem:[#allocation11 + $0x8] sm:$0xff]
    %v1331 = vld [vmem:[#allocation11 + $0x10] sm:$0xff]
    %v1332 = vld [vmem:[#allocation11 + $0x18] sm:$0xff]
    %v1333 = vld [vmem:[#allocation11 + $0x20] sm:$0xff]
    %v1334 = vld [vmem:[#allocation11 + $0x28] sm:$0xff]
    %v1335 = vld [vmem:[#allocation11 + $0x30] sm:$0xff]
    %v1336 = vld [vmem:[#allocation11 + $0x38] sm:$0xff]
    %v1337 = vld [vmem:[#allocation11 + $0x40] sm:$0xff]
    %v1338 = vld [vmem:[#allocation11 + $0x48] sm:$0xff]
    %v1339 = vld [vmem:[#allocation11 + $0x50] sm:$0xff]
    %v1340 = vld [vmem:[#allocation11 + $0x58] sm:$0xff]
    %v1341 = vld [vmem:[#allocation11 + $0x60] sm:$0xff]
    %v1342 = vld [vmem:[#allocation11 + $0x68] sm:$0xff]
    %v1343 = vld [vmem:[#allocation11 + $0x70] sm:$0xff]
    %v1344 = vld [vmem:[#allocation11 + $0x78] sm:$0xff]
    %v1345 = vld [vmem:[#allocation13] sm:$0xff]
    %v1346 = vld [vmem:[#allocation13 + $0x8] sm:$0xff]
    %v1347 = vld [vmem:[#allocation13 + $0x10] sm:$0xff]
    %v1348 = vld [vmem:[#allocation13 + $0x18] sm:$0xff]
    %v1349 = vld [vmem:[#allocation13 + $0x20] sm:$0xff]
    %v1350 = vld [vmem:[#allocation13 + $0x28] sm:$0xff]
    %v1351 = vld [vmem:[#allocation13 + $0x30] sm:$0xff]
    %v1352 = vld [vmem:[#allocation13 + $0x38] sm:$0xff]
    %v1353 = vld [vmem:[#allocation13 + $0x40] sm:$0xff]
    %v1354 = vld [vmem:[#allocation13 + $0x48] sm:$0xff]
    %v1355 = vld [vmem:[#allocation13 + $0x50] sm:$0xff]
    %v1356 = vld [vmem:[#allocation13 + $0x58] sm:$0xff]
    %v1357 = vld [vmem:[#allocation13 + $0x60] sm:$0xff]
    %v1358 = vld [vmem:[#allocation13 + $0x68] sm:$0xff]
    %v1359 = vld [vmem:[#allocation13 + $0x70] sm:$0xff]
    %v1360 = vld [vmem:[#allocation13 + $0x78] sm:$0xff]
    %1361 = vmatprep.subr.mxu0 0.0
    %1362 = vmatpush1.msra.mxu0 %v1345
    %1363 = vmatprep.subr.mxu0 0.0
    %1364 = vmatpush1.msra.mxu0 %v1346
    %1365 = vmatprep.subr.mxu0 0.0
    %1366 = vmatpush1.msra.mxu0 %v1347
    %1367 = vmatprep.subr.mxu0 0.0
    %1368 = vmatpush1.msra.mxu0 %v1348
    %1369 = vmatprep.subr.mxu0 0.0
    %1370 = vmatpush1.msra.mxu0 %v1349
    %1371 = vmatprep.subr.mxu0 0.0
    %1372 = vmatpush1.msra.mxu0 %v1350
    %1373 = vmatprep.subr.mxu0 0.0
    %1374 = vmatpush1.msra.mxu0 %v1351
    %1375 = vmatprep.subr.mxu0 0.0
    %1376 = vmatpush1.msra.mxu0 %v1352
    %1377 = vmatprep.subr.mxu0 0.0
    %1378 = vmatpush1.msra.mxu0 %v1353
    %1379 = vmatprep.subr.mxu0 0.0
    %1380 = vmatpush1.msra.mxu0 %v1354
    %1381 = vmatprep.subr.mxu0 0.0
    %1382 = vmatpush1.msra.mxu0 %v1355
    %1383 = vmatprep.subr.mxu0 0.0
    %1384 = vmatpush1.msra.mxu0 %v1356
    %1385 = vmatprep.subr.mxu0 0.0
    %1386 = vmatpush1.msra.mxu0 %v1357
    %1387 = vmatprep.subr.mxu0 0.0
    %1388 = vmatpush1.msra.mxu0 %v1358
    %1389 = vmatprep.subr.mxu0 0.0
    %1390 = vmatpush1.msra.mxu0 %v1359
    %1391 = vmatprep.subr.mxu0 0.0
    %1392 = vmatpush1.msra.mxu0 %v1360
    %1393 = vmatprep.subr.mxu0 0.0
    %1394 = vmatpush1.msra.mxu0 0.0
    %1395 = vmatprep.subr.mxu0 0.0
    %1396 = vmatpush1.msra.mxu0 0.0
    %1397 = vmatprep.subr.mxu0 0.0
    %1398 = vmatpush1.msra.mxu0 0.0
    %1399 = vmatprep.subr.mxu0 0.0
    %1400 = vmatpush1.msra.mxu0 0.0
    %1401 = vmatprep.subr.mxu0 0.0
    %1402 = vmatpush1.msra.mxu0 0.0
    %1403 = vmatprep.subr.mxu0 0.0
    %1404 = vmatpush1.msra.mxu0 0.0
    %1405 = vmatprep.subr.mxu0 0.0
    %1406 = vmatpush1.msra.mxu0 0.0
    %1407 = vmatprep.subr.mxu0 0.0
    %1408 = vmatpush1.msra.mxu0 0.0
    %1409 = vmatprep.subr.mxu0 0.0
    %1410 = vmatpush1.msra.mxu0 0.0
    %1411 = vmatprep.subr.mxu0 0.0
    %1412 = vmatpush1.msra.mxu0 0.0
    %1413 = vmatprep.subr.mxu0 0.0
    %1414 = vmatpush1.msra.mxu0 0.0
    %1415 = vmatprep.subr.mxu0 0.0
    %1416 = vmatpush1.msra.mxu0 0.0
    %1417 = vmatprep.subr.mxu0 0.0
    %1418 = vmatpush1.msra.mxu0 0.0
    %1419 = vmatprep.subr.mxu0 0.0
    %1420 = vmatpush1.msra.mxu0 0.0
    %1421 = vmatprep.subr.mxu0 0.0
    %1422 = vmatpush1.msra.mxu0 0.0
    %1423 = vmatprep.subr.mxu0 0.0
    %1424 = vmatpush1.msra.mxu0 0.0
    %1425 = vmatprep.mubr.f32.mxu0 0.0
    %1426 = vmatmul.mubr.f32.gmra.mrb[0].mxu0 %v1297
    %v1427 = vpop.f32.mrb[0].mxu0
    %v1428 = vadd.f32 0.0, %v1427
    %v1429 = vpop.f32.mrb[0].mxu0
    %1430 = vmatprep.mubr.f32.mxu0 0.0
    %1431 = vmatmul.mubr.f32.gmra.mrb[0].mxu0 %v1298
    %v1432 = vpop.f32.mrb[0].mxu0
    %v1433 = vadd.f32 0.0, %v1432
    %v1434 = vpop.f32.mrb[0].mxu0
    %1435 = vmatprep.mubr.f32.mxu0 0.0
    %1436 = vmatmul.mubr.f32.gmra.mrb[0].mxu0 %v1299
    %v1437 = vpop.f32.mrb[0].mxu0
    %v1438 = vadd.f32 0.0, %v1437
    %v1439 = vpop.f32.mrb[0].mxu0
    %1440 = vmatprep.mubr.f32.mxu0 0.0
    %1441 = vmatmul.mubr.f32.gmra.mrb[0].mxu0 %v1300
    %v1442 = vpop.f32.mrb[0].mxu0
    %v1443 = vadd.f32 0.0, %v1442
    %v1444 = vpop.f32.mrb[0].mxu0
    %1445 = vmatprep.mubr.f32.mxu0 0.0
    %1446 = vmatmul.mubr.f32.gmra.mrb[0].mxu0 %v1301
    %v1447 = vpop.f32.mrb[0].mxu0
    %v1448 = vadd.f32 0.0, %v1447
    %v1449 = vpop.f32.mrb[0].mxu0
    %1450 = vmatprep.mubr.f32.mxu0 0.0
    %1451 = vmatmul.mubr.f32.gmra.mrb[0].mxu0 %v1302
    %v1452 = vpop.f32.mrb[0].mxu0
    %v1453 = vadd.f32 0.0, %v1452
    %v1454 = vpop.f32.mrb[0].mxu0
    %1455 = vmatprep.mubr.f32.mxu0 0.0
    %1456 = vmatmul.mubr.f32.gmra.mrb[0].mxu0 %v1303
    %v1457 = vpop.f32.mrb[0].mxu0
    %v1458 = vadd.f32 0.0, %v1457
    %v1459 = vpop.f32.mrb[0].mxu0
    %1460 = vmatprep.mubr.f32.mxu0 0.0
    %1461 = vmatmul.mubr.f32.gmra.mrb[0].mxu0 %v1304
    %v1462 = vpop.f32.mrb[0].mxu0
    %v1463 = vadd.f32 0.0, %v1462
    %v1464 = vpop.f32.mrb[0].mxu0
    %1465 = vmatprep.mubr.f32.mxu0 0.0
    %1466 = vmatmul.mubr.f32.gmra.mrb[0].mxu0 %v1305
    %v1467 = vpop.f32.mrb[0].mxu0
    %v1468 = vadd.f32 0.0, %v1467
    %v1469 = vpop.f32.mrb[0].mxu0
    %1470 = vmatprep.mubr.f32.mxu0 0.0
    %1471 = vmatmul.mubr.f32.gmra.mrb[0].mxu0 %v1306
    %v1472 = vpop.f32.mrb[0].mxu0
    %v1473 = vadd.f32 0.0, %v1472
    %v1474 = vpop.f32.mrb[0].mxu0
    %1475 = vmatprep.mubr.f32.mxu0 0.0
    %1476 = vmatmul.mubr.f32.gmra.mrb[0].mxu0 %v1307
    %v1477 = vpop.f32.mrb[0].mxu0
    %v1478 = vadd.f32 0.0, %v1477
    %v1479 = vpop.f32.mrb[0].mxu0
    %1480 = vmatprep.mubr.f32.mxu0 0.0
    %1481 = vmatmul.mubr.f32.gmra.mrb[0].mxu0 %v1308
    %v1482 = vpop.f32.mrb[0].mxu0
    %v1483 = vadd.f32 0.0, %v1482
    %v1484 = vpop.f32.mrb[0].mxu0
    %1485 = vmatprep.mubr.f32.mxu0 0.0
    %1486 = vmatmul.mubr.f32.gmra.mrb[0].mxu0 %v1309
    %v1487 = vpop.f32.mrb[0].mxu0
    %v1488 = vadd.f32 0.0, %v1487
    %v1489 = vpop.f32.mrb[0].mxu0
    %1490 = vmatprep.mubr.f32.mxu0 0.0
    %1491 = vmatmul.mubr.f32.gmra.mrb[0].mxu0 %v1310
    %v1492 = vpop.f32.mrb[0].mxu0
    %v1493 = vadd.f32 0.0, %v1492
    %v1494 = vpop.f32.mrb[0].mxu0
    %1495 = vmatprep.mubr.f32.mxu0 0.0
    %1496 = vmatmul.mubr.f32.gmra.mrb[0].mxu0 %v1311
    %v1497 = vpop.f32.mrb[0].mxu0
    %v1498 = vadd.f32 0.0, %v1497
    %v1499 = vpop.f32.mrb[0].mxu0
    %1500 = vmatprep.mubr.f32.mxu0 0.0
    %1501 = vmatmul.mubr.f32.gmra.mrb[0].mxu0 %v1312
    %v1502 = vpop.f32.mrb[0].mxu0
    %v1503 = vadd.f32 0.0, %v1502
    %v1504 = vpop.f32.mrb[0].mxu0
    %1505 = vdwg.mxu0
    %1506 = vmatprep.subr.mxu0 0.0
    %1507 = vmatpush1.msra.mxu0 %v1329
    %1508 = vmatprep.subr.mxu0 0.0
    %1509 = vmatpush1.msra.mxu0 %v1330
    %1510 = vmatprep.subr.mxu0 0.0
    %1511 = vmatpush1.msra.mxu0 %v1331
    %1512 = vmatprep.subr.mxu0 0.0
    %1513 = vmatpush1.msra.mxu0 %v1332
    %1514 = vmatprep.subr.mxu0 0.0
    %1515 = vmatpush1.msra.mxu0 %v1333
    %1516 = vmatprep.subr.mxu0 0.0
    %1517 = vmatpush1.msra.mxu0 %v1334
    %1518 = vmatprep.subr.mxu0 0.0
    %1519 = vmatpush1.msra.mxu0 %v1335
    %1520 = vmatprep.subr.mxu0 0.0
    %1521 = vmatpush1.msra.mxu0 %v1336
    %1522 = vmatprep.subr.mxu0 0.0
    %1523 = vmatpush1.msra.mxu0 %v1337
    %1524 = vmatprep.subr.mxu0 0.0
    %1525 = vmatpush1.msra.mxu0 %v1338
    %1526 = vmatprep.subr.mxu0 0.0
    %1527 = vmatpush1.msra.mxu0 %v1339
    %1528 = vmatprep.subr.mxu0 0.0
    %1529 = vmatpush1.msra.mxu0 %v1340
    %1530 = vmatprep.subr.mxu0 0.0
    %1531 = vmatpush1.msra.mxu0 %v1341
    %1532 = vmatprep.subr.mxu0 0.0
    %1533 = vmatpush1.msra.mxu0 %v1342
    %1534 = vmatprep.subr.mxu0 0.0
    %1535 = vmatpush1.msra.mxu0 %v1343
    %1536 = vmatprep.subr.mxu0 0.0
    %1537 = vmatpush1.msra.mxu0 %v1344
    %1538 = vmatprep.subr.mxu0 0.0
    %1539 = vmatpush1.msra.mxu0 0.0
    %1540 = vmatprep.subr.mxu0 0.0
    %1541 = vmatpush1.msra.mxu0 0.0
    %1542 = vmatprep.subr.mxu0 0.0
    %1543 = vmatpush1.msra.mxu0 0.0
    %1544 = vmatprep.subr.mxu0 0.0
    %1545 = vmatpush1.msra.mxu0 0.0
    %1546 = vmatprep.subr.mxu0 0.0
    %1547 = vmatpush1.msra.mxu0 0.0
    %1548 = vmatprep.subr.mxu0 0.0
    %1549 = vmatpush1.msra.mxu0 0.0
    %1550 = vmatprep.subr.mxu0 0.0
    %1551 = vmatpush1.msra.mxu0 0.0
    %1552 = vmatprep.subr.mxu0 0.0
    %1553 = vmatpush1.msra.mxu0 0.0
    %1554 = vmatprep.subr.mxu0 0.0
    %1555 = vmatpush1.msra.mxu0 0.0
    %1556 = vmatprep.subr.mxu0 0.0
    %1557 = vmatpush1.msra.mxu0 0.0
    %1558 = vmatprep.subr.mxu0 0.0
    %1559 = vmatpush1.msra.mxu0 0.0
    %1560 = vmatprep.subr.mxu0 0.0
    %1561 = vmatpush1.msra.mxu0 0.0
    %1562 = vmatprep.subr.mxu0 0.0
    %1563 = vmatpush1.msra.mxu0 0.0
    %1564 = vmatprep.subr.mxu0 0.0
    %1565 = vmatpush1.msra.mxu0 0.0
    %1566 = vmatprep.subr.mxu0 0.0
    %1567 = vmatpush1.msra.mxu0 0.0
    %1568 = vmatprep.subr.mxu0 0.0
    %1569 = vmatpush1.msra.mxu0 0.0
    %1570 = vmatprep.mubr.f32.mxu0 0.0
    %1571 = vmatmul.mubr.f32.gmra.mrb[0].mxu0 %v1313
    %v1572 = vpop.f32.mrb[0].mxu0
    %v1573 = vadd.f32 %v1428, %v1572
    %v1574 = vpop.f32.mrb[0].mxu0
    %1575 = vmatprep.mubr.f32.mxu0 0.0
    %1576 = vmatmul.mubr.f32.gmra.mrb[0].mxu0 %v1314
    %v1577 = vpop.f32.mrb[0].mxu0
    %v1578 = vadd.f32 %v1433, %v1577
    %v1579 = vpop.f32.mrb[0].mxu0
    %1580 = vmatprep.mubr.f32.mxu0 0.0
    %1581 = vmatmul.mubr.f32.gmra.mrb[0].mxu0 %v1315
    %v1582 = vpop.f32.mrb[0].mxu0
    %v1583 = vadd.f32 %v1438, %v1582
    %v1584 = vpop.f32.mrb[0].mxu0
    %1585 = vmatprep.mubr.f32.mxu0 0.0
    %1586 = vmatmul.mubr.f32.gmra.mrb[0].mxu0 %v1316
    %v1587 = vpop.f32.mrb[0].mxu0
    %v1588 = vadd.f32 %v1443, %v1587
    %v1589 = vpop.f32.mrb[0].mxu0
    %1590 = vmatprep.mubr.f32.mxu0 0.0
    %1591 = vmatmul.mubr.f32.gmra.mrb[0].mxu0 %v1317
    %v1592 = vpop.f32.mrb[0].mxu0
    %v1593 = vadd.f32 %v1448, %v1592
    %v1594 = vpop.f32.mrb[0].mxu0
    %1595 = vmatprep.mubr.f32.mxu0 0.0
    %1596 = vmatmul.mubr.f32.gmra.mrb[0].mxu0 %v1318
    %v1597 = vpop.f32.mrb[0].mxu0
    %v1598 = vadd.f32 %v1453, %v1597
    %v1599 = vpop.f32.mrb[0].mxu0
    %1600 = vmatprep.mubr.f32.mxu0 0.0
    %1601 = vmatmul.mubr.f32.gmra.mrb[0].mxu0 %v1319
    %v1602 = vpop.f32.mrb[0].mxu0
    %v1603 = vadd.f32 %v1458, %v1602
    %v1604 = vpop.f32.mrb[0].mxu0
    %1605 = vmatprep.mubr.f32.mxu0 0.0
    %1606 = vmatmul.mubr.f32.gmra.mrb[0].mxu0 %v1320
    %v1607 = vpop.f32.mrb[0].mxu0
    %v1608 = vadd.f32 %v1463, %v1607
    %v1609 = vpop.f32.mrb[0].mxu0
    %1610 = vmatprep.mubr.f32.mxu0 0.0
    %1611 = vmatmul.mubr.f32.gmra.mrb[0].mxu0 %v1321
    %v1612 = vpop.f32.mrb[0].mxu0
    %v1613 = vadd.f32 %v1468, %v1612
    %v1614 = vpop.f32.mrb[0].mxu0
    %1615 = vmatprep.mubr.f32.mxu0 0.0
    %1616 = vmatmul.mubr.f32.gmra.mrb[0].mxu0 %v1322
    %v1617 = vpop.f32.mrb[0].mxu0
    %v1618 = vadd.f32 %v1473, %v1617
    %v1619 = vpop.f32.mrb[0].mxu0
    %1620 = vmatprep.mubr.f32.mxu0 0.0
    %1621 = vmatmul.mubr.f32.gmra.mrb[0].mxu0 %v1323
    %v1622 = vpop.f32.mrb[0].mxu0
    %v1623 = vadd.f32 %v1478, %v1622
    %v1624 = vpop.f32.mrb[0].mxu0
    %1625 = vmatprep.mubr.f32.mxu0 0.0
    %1626 = vmatmul.mubr.f32.gmra.mrb[0].mxu0 %v1324
    %v1627 = vpop.f32.mrb[0].mxu0
    %v1628 = vadd.f32 %v1483, %v1627
    %v1629 = vpop.f32.mrb[0].mxu0
    %1630 = vmatprep.mubr.f32.mxu0 0.0
    %1631 = vmatmul.mubr.f32.gmra.mrb[0].mxu0 %v1325
    %v1632 = vpop.f32.mrb[0].mxu0
    %v1633 = vadd.f32 %v1488, %v1632
    %v1634 = vpop.f32.mrb[0].mxu0
    %1635 = vmatprep.mubr.f32.mxu0 0.0
    %1636 = vmatmul.mubr.f32.gmra.mrb[0].mxu0 %v1326
    %v1637 = vpop.f32.mrb[0].mxu0
    %v1638 = vadd.f32 %v1493, %v1637
    %v1639 = vpop.f32.mrb[0].mxu0
    %1640 = vmatprep.mubr.f32.mxu0 0.0
    %1641 = vmatmul.mubr.f32.gmra.mrb[0].mxu0 %v1327
    %v1642 = vpop.f32.mrb[0].mxu0
    %v1643 = vadd.f32 %v1498, %v1642
    %v1644 = vpop.f32.mrb[0].mxu0
    %1645 = vmatprep.mubr.f32.mxu0 0.0
    %1646 = vmatmul.mubr.f32.gmra.mrb[0].mxu0 %v1328
    %v1647 = vpop.f32.mrb[0].mxu0
    %v1648 = vadd.f32 %v1503, %v1647
    %v1649 = vpop.f32.mrb[0].mxu0
    %1650 = vdwg.mxu0
    %v1652 = vlaneseq
    %v1653 = vshrl.u32 %v1652, 7
    %v1654 = vsub.s32 0, %v1653
    %v1655 = vrot.slane %v153, %v1654
    %v1657 = vadd.f32 %v1573, %v1655
    %v1658 = vadd.f32 %v1578, %v1655
    %v1659 = vadd.f32 %v1583, %v1655
    %v1660 = vadd.f32 %v1588, %v1655
    %v1661 = vadd.f32 %v1593, %v1655
    %v1662 = vadd.f32 %v1598, %v1655
    %v1663 = vadd.f32 %v1603, %v1655
    %v1664 = vadd.f32 %v1608, %v1655
    %v1665 = vadd.f32 %v1613, %v1655
    %v1666 = vadd.f32 %v1618, %v1655
    %v1667 = vadd.f32 %v1623, %v1655
    %v1668 = vadd.f32 %v1628, %v1655
    %v1669 = vadd.f32 %v1633, %v1655
    %v1670 = vadd.f32 %v1638, %v1655
    %v1671 = vadd.f32 %v1643, %v1655
    %v1672 = vadd.f32 %v1648, %v1655
    %v1673 = vmax.f32 %v1657, 0.0
    %v1674 = vmax.f32 %v1658, 0.0
    %v1675 = vmax.f32 %v1659, 0.0
    %v1676 = vmax.f32 %v1660, 0.0
    %v1677 = vmax.f32 %v1661, 0.0
    %v1678 = vmax.f32 %v1662, 0.0
    %v1679 = vmax.f32 %v1663, 0.0
    %v1680 = vmax.f32 %v1664, 0.0
    %v1681 = vmax.f32 %v1665, 0.0
    %v1682 = vmax.f32 %v1666, 0.0
    %v1683 = vmax.f32 %v1667, 0.0
    %v1684 = vmax.f32 %v1668, 0.0
    %v1685 = vmax.f32 %v1669, 0.0
    %v1686 = vmax.f32 %v1670, 0.0
    %v1687 = vmax.f32 %v1671, 0.0
    %v1688 = vmax.f32 %v1672, 0.0
    %v1689 = vld [vmem:[#allocation14] sm:$0xff]
    %v1690 = vld [vmem:[#allocation14 + $0x8] sm:$0xff]
    %v1691 = vld [vmem:[#allocation14 + $0x10] sm:$0xff]
    %v1692 = vld [vmem:[#allocation14 + $0x18] sm:$0xff]
    %v1693 = vld [vmem:[#allocation14 + $0x20] sm:$0xff]
    %v1694 = vld [vmem:[#allocation14 + $0x28] sm:$0xff]
    %v1695 = vld [vmem:[#allocation14 + $0x30] sm:$0xff]
    %v1696 = vld [vmem:[#allocation14 + $0x38] sm:$0xff]
    %v1697 = vld [vmem:[#allocation14 + $0x40] sm:$0xff]
    %v1698 = vld [vmem:[#allocation14 + $0x48] sm:$0xff]
    %v1699 = vld [vmem:[#allocation14 + $0x50] sm:$0xff]
    %v1700 = vld [vmem:[#allocation14 + $0x58] sm:$0xff]
    %v1701 = vld [vmem:[#allocation14 + $0x60] sm:$0xff]
    %v1702 = vld [vmem:[#allocation14 + $0x68] sm:$0xff]
    %v1703 = vld [vmem:[#allocation14 + $0x70] sm:$0xff]
    %v1704 = vld [vmem:[#allocation14 + $0x78] sm:$0xff]
    %v1706 = vlaneseq
    %v1707 = vshrl.u32 %v1706, 7
    %v1708 = vsub.s32 0, %v1707
    %v1709 = vrot.slane %v154, %v1708
    %1711 = vmatprep.subr.mxu0 0.0
    %1712 = vmatpush1.msra.mxu0 %v1689
    %1713 = vmatprep.subr.mxu0 0.0
    %1714 = vmatpush1.msra.mxu0 %v1690
    %1715 = vmatprep.subr.mxu0 0.0
    %1716 = vmatpush1.msra.mxu0 %v1691
    %1717 = vmatprep.subr.mxu0 0.0
    %1718 = vmatpush1.msra.mxu0 %v1692
    %1719 = vmatprep.subr.mxu0 0.0
    %1720 = vmatpush1.msra.mxu0 %v1693
    %1721 = vmatprep.subr.mxu0 0.0
    %1722 = vmatpush1.msra.mxu0 %v1694
    %1723 = vmatprep.subr.mxu0 0.0
    %1724 = vmatpush1.msra.mxu0 %v1695
    %1725 = vmatprep.subr.mxu0 0.0
    %1726 = vmatpush1.msra.mxu0 %v1696
    %1727 = vmatprep.subr.mxu0 0.0
    %1728 = vmatpush1.msra.mxu0 %v1697
    %1729 = vmatprep.subr.mxu0 0.0
    %1730 = vmatpush1.msra.mxu0 %v1698
    %1731 = vmatprep.subr.mxu0 0.0
    %1732 = vmatpush1.msra.mxu0 %v1699
    %1733 = vmatprep.subr.mxu0 0.0
    %1734 = vmatpush1.msra.mxu0 %v1700
    %1735 = vmatprep.subr.mxu0 0.0
    %1736 = vmatpush1.msra.mxu0 %v1701
    %1737 = vmatprep.subr.mxu0 0.0
    %1738 = vmatpush1.msra.mxu0 %v1702
    %1739 = vmatprep.subr.mxu0 0.0
    %1740 = vmatpush1.msra.mxu0 %v1703
    %1741 = vmatprep.subr.mxu0 0.0
    %1742 = vmatpush1.msra.mxu0 %v1704
    %1743 = vmatprep.subr.mxu0 0.0
    %1744 = vmatpush1.msra.mxu0 0.0
    %1745 = vmatprep.subr.mxu0 0.0
    %1746 = vmatpush1.msra.mxu0 0.0
    %1747 = vmatprep.subr.mxu0 0.0
    %1748 = vmatpush1.msra.mxu0 0.0
    %1749 = vmatprep.subr.mxu0 0.0
    %1750 = vmatpush1.msra.mxu0 0.0
    %1751 = vmatprep.subr.mxu0 0.0
    %1752 = vmatpush1.msra.mxu0 0.0
    %1753 = vmatprep.subr.mxu0 0.0
    %1754 = vmatpush1.msra.mxu0 0.0
    %1755 = vmatprep.subr.mxu0 0.0
    %1756 = vmatpush1.msra.mxu0 0.0
    %1757 = vmatprep.subr.mxu0 0.0
    %1758 = vmatpush1.msra.mxu0 0.0
    %1759 = vmatprep.subr.mxu0 0.0
    %1760 = vmatpush1.msra.mxu0 0.0
    %1761 = vmatprep.subr.mxu0 0.0
    %1762 = vmatpush1.msra.mxu0 0.0
    %1763 = vmatprep.subr.mxu0 0.0
    %1764 = vmatpush1.msra.mxu0 0.0
    %1765 = vmatprep.subr.mxu0 0.0
    %1766 = vmatpush1.msra.mxu0 0.0
    %1767 = vmatprep.subr.mxu0 0.0
    %1768 = vmatpush1.msra.mxu0 0.0
    %1769 = vmatprep.subr.mxu0 0.0
    %1770 = vmatpush1.msra.mxu0 0.0
    %1771 = vmatprep.subr.mxu0 0.0
    %1772 = vmatpush1.msra.mxu0 0.0
    %1773 = vmatprep.subr.mxu0 0.0
    %1774 = vmatpush1.msra.mxu0 0.0
    %1775 = vmatprep.mubr.f32.mxu0 0.0
    %1776 = vmatmul.mubr.f32.gmra.mrb[0].mxu0 %v1673
    %v1777 = vpop.f32.mrb[0].mxu0
    %v1778 = vadd.f32 %v1709, %v1777
    %v1779 = vpop.f32.mrb[0].mxu0
    %1780 = vmatprep.mubr.f32.mxu0 0.0
    %1781 = vmatmul.mubr.f32.gmra.mrb[0].mxu0 %v1674
    %v1782 = vpop.f32.mrb[0].mxu0
    %v1783 = vadd.f32 %v1709, %v1782
    %v1784 = vpop.f32.mrb[0].mxu0
    %1785 = vmatprep.mubr.f32.mxu0 0.0
    %1786 = vmatmul.mubr.f32.gmra.mrb[0].mxu0 %v1675
    %v1787 = vpop.f32.mrb[0].mxu0
    %v1788 = vadd.f32 %v1709, %v1787
    %v1789 = vpop.f32.mrb[0].mxu0
    %1790 = vmatprep.mubr.f32.mxu0 0.0
    %1791 = vmatmul.mubr.f32.gmra.mrb[0].mxu0 %v1676
    %v1792 = vpop.f32.mrb[0].mxu0
    %v1793 = vadd.f32 %v1709, %v1792
    %v1794 = vpop.f32.mrb[0].mxu0
    %1795 = vmatprep.mubr.f32.mxu0 0.0
    %1796 = vmatmul.mubr.f32.gmra.mrb[0].mxu0 %v1677
    %v1797 = vpop.f32.mrb[0].mxu0
    %v1798 = vadd.f32 %v1709, %v1797
    %v1799 = vpop.f32.mrb[0].mxu0
    %1800 = vmatprep.mubr.f32.mxu0 0.0
    %1801 = vmatmul.mubr.f32.gmra.mrb[0].mxu0 %v1678
    %v1802 = vpop.f32.mrb[0].mxu0
    %v1803 = vadd.f32 %v1709, %v1802
    %v1804 = vpop.f32.mrb[0].mxu0
    %1805 = vmatprep.mubr.f32.mxu0 0.0
    %1806 = vmatmul.mubr.f32.gmra.mrb[0].mxu0 %v1679
    %v1807 = vpop.f32.mrb[0].mxu0
    %v1808 = vadd.f32 %v1709, %v1807
    %v1809 = vpop.f32.mrb[0].mxu0
    %1810 = vmatprep.mubr.f32.mxu0 0.0
    %1811 = vmatmul.mubr.f32.gmra.mrb[0].mxu0 %v1680
    %v1812 = vpop.f32.mrb[0].mxu0
    %v1813 = vadd.f32 %v1709, %v1812
    %v1814 = vpop.f32.mrb[0].mxu0
    %1815 = vmatprep.mubr.f32.mxu0 0.0
    %1816 = vmatmul.mubr.f32.gmra.mrb[0].mxu0 %v1681
    %v1817 = vpop.f32.mrb[0].mxu0
    %v1818 = vadd.f32 %v1709, %v1817
    %v1819 = vpop.f32.mrb[0].mxu0
    %1820 = vmatprep.mubr.f32.mxu0 0.0
    %1821 = vmatmul.mubr.f32.gmra.mrb[0].mxu0 %v1682
    %v1822 = vpop.f32.mrb[0].mxu0
    %v1823 = vadd.f32 %v1709, %v1822
    %v1824 = vpop.f32.mrb[0].mxu0
    %1825 = vmatprep.mubr.f32.mxu0 0.0
    %1826 = vmatmul.mubr.f32.gmra.mrb[0].mxu0 %v1683
    %v1827 = vpop.f32.mrb[0].mxu0
    %v1828 = vadd.f32 %v1709, %v1827
    %v1829 = vpop.f32.mrb[0].mxu0
    %1830 = vmatprep.mubr.f32.mxu0 0.0
    %1831 = vmatmul.mubr.f32.gmra.mrb[0].mxu0 %v1684
    %v1832 = vpop.f32.mrb[0].mxu0
    %v1833 = vadd.f32 %v1709, %v1832
    %v1834 = vpop.f32.mrb[0].mxu0
    %1835 = vmatprep.mubr.f32.mxu0 0.0
    %1836 = vmatmul.mubr.f32.gmra.mrb[0].mxu0 %v1685
    %v1837 = vpop.f32.mrb[0].mxu0
    %v1838 = vadd.f32 %v1709, %v1837
    %v1839 = vpop.f32.mrb[0].mxu0
    %1840 = vmatprep.mubr.f32.mxu0 0.0
    %1841 = vmatmul.mubr.f32.gmra.mrb[0].mxu0 %v1686
    %v1842 = vpop.f32.mrb[0].mxu0
    %v1843 = vadd.f32 %v1709, %v1842
    %v1844 = vpop.f32.mrb[0].mxu0
    %1845 = vmatprep.mubr.f32.mxu0 0.0
    %1846 = vmatmul.mubr.f32.gmra.mrb[0].mxu0 %v1687
    %v1847 = vpop.f32.mrb[0].mxu0
    %v1848 = vadd.f32 %v1709, %v1847
    %v1849 = vpop.f32.mrb[0].mxu0
    %1850 = vmatprep.mubr.f32.mxu0 0.0
    %1851 = vmatmul.mubr.f32.gmra.mrb[0].mxu0 %v1688
    %v1852 = vpop.f32.mrb[0].mxu0
    %v1853 = vadd.f32 %v1709, %v1852
    %v1854 = vpop.f32.mrb[0].mxu0
    %1855 = vdwg.mxu0
    %1856 = vmax.xlane.f32.xlu0 %v1778
    %v1857 = vpop.xlane.xlu0 %1856
    %1858 = vmax.xlane.f32.xlu0 %v1783
    %v1859 = vpop.xlane.xlu0 %1858
    %1860 = vmax.xlane.f32.xlu0 %v1788
    %v1861 = vpop.xlane.xlu0 %1860
    %1862 = vmax.xlane.f32.xlu0 %v1793
    %v1863 = vpop.xlane.xlu0 %1862
    %1864 = vmax.xlane.f32.xlu0 %v1798
    %v1865 = vpop.xlane.xlu0 %1864
    %1866 = vmax.xlane.f32.xlu0 %v1803
    %v1867 = vpop.xlane.xlu0 %1866
    %1868 = vmax.xlane.f32.xlu0 %v1808
    %v1869 = vpop.xlane.xlu0 %1868
    %1870 = vmax.xlane.f32.xlu0 %v1813
    %v1871 = vpop.xlane.xlu0 %1870
    %1872 = vmax.xlane.f32.xlu0 %v1818
    %v1873 = vpop.xlane.xlu0 %1872
    %1874 = vmax.xlane.f32.xlu0 %v1823
    %v1875 = vpop.xlane.xlu0 %1874
    %1876 = vmax.xlane.f32.xlu0 %v1828
    %v1877 = vpop.xlane.xlu0 %1876
    %1878 = vmax.xlane.f32.xlu0 %v1833
    %v1879 = vpop.xlane.xlu0 %1878
    %1880 = vmax.xlane.f32.xlu0 %v1838
    %v1881 = vpop.xlane.xlu0 %1880
    %1882 = vmax.xlane.f32.xlu0 %v1843
    %v1883 = vpop.xlane.xlu0 %1882
    %1884 = vmax.xlane.f32.xlu0 %v1848
    %v1885 = vpop.xlane.xlu0 %1884
    %1886 = vmax.xlane.f32.xlu0 %v1853
    %v1887 = vpop.xlane.xlu0 %1886
    %v1888 = vsub.f32 %v1778, %v1857
    %v1889 = vsub.f32 %v1783, %v1859
    %v1890 = vsub.f32 %v1788, %v1861
    %v1891 = vsub.f32 %v1793, %v1863
    %v1892 = vsub.f32 %v1798, %v1865
    %v1893 = vsub.f32 %v1803, %v1867
    %v1894 = vsub.f32 %v1808, %v1869
    %v1895 = vsub.f32 %v1813, %v1871
    %v1896 = vsub.f32 %v1818, %v1873
    %v1897 = vsub.f32 %v1823, %v1875
    %v1898 = vsub.f32 %v1828, %v1877
    %v1899 = vsub.f32 %v1833, %v1879
    %v1900 = vsub.f32 %v1838, %v1881
    %v1901 = vsub.f32 %v1843, %v1883
    %v1902 = vsub.f32 %v1848, %v1885
    %v1903 = vsub.f32 %v1853, %v1887
    %v1904 = vmul.f32 %v1888, 1.442695
    %v1905 = vpow.pop %v1904
    %v1906 = vmul.f32 %v1889, 1.442695
    %v1907 = vpow.pop %v1906
    %v1908 = vmul.f32 %v1890, 1.442695
    %v1909 = vpow.pop %v1908
    %v1910 = vmul.f32 %v1891, 1.442695
    %v1911 = vpow.pop %v1910
    %v1912 = vmul.f32 %v1892, 1.442695
    %v1913 = vpow.pop %v1912
    %v1914 = vmul.f32 %v1893, 1.442695
    %v1915 = vpow.pop %v1914
    %v1916 = vmul.f32 %v1894, 1.442695
    %v1917 = vpow.pop %v1916
    %v1918 = vmul.f32 %v1895, 1.442695
    %v1919 = vpow.pop %v1918
    %v1920 = vmul.f32 %v1896, 1.442695
    %v1921 = vpow.pop %v1920
    %v1922 = vmul.f32 %v1897, 1.442695
    %v1923 = vpow.pop %v1922
    %v1924 = vmul.f32 %v1898, 1.442695
    %v1925 = vpow.pop %v1924
    %v1926 = vmul.f32 %v1899, 1.442695
    %v1927 = vpow.pop %v1926
    %v1928 = vmul.f32 %v1900, 1.442695
    %v1929 = vpow.pop %v1928
    %v1930 = vmul.f32 %v1901, 1.442695
    %v1931 = vpow.pop %v1930
    %v1932 = vmul.f32 %v1902, 1.442695
    %v1933 = vpow.pop %v1932
    %v1934 = vmul.f32 %v1903, 1.442695
    %v1935 = vpow.pop %v1934
    %1936 = vadd.xlane.f32.xlu0 %v1905
    %v1937 = vpop.xlane.xlu0 %1936
    %1938 = vadd.xlane.f32.xlu0 %v1907
    %v1939 = vpop.xlane.xlu0 %1938
    %1940 = vadd.xlane.f32.xlu0 %v1909
    %v1941 = vpop.xlane.xlu0 %1940
    %1942 = vadd.xlane.f32.xlu0 %v1911
    %v1943 = vpop.xlane.xlu0 %1942
    %1944 = vadd.xlane.f32.xlu0 %v1913
    %v1945 = vpop.xlane.xlu0 %1944
    %1946 = vadd.xlane.f32.xlu0 %v1915
    %v1947 = vpop.xlane.xlu0 %1946
    %1948 = vadd.xlane.f32.xlu0 %v1917
    %v1949 = vpop.xlane.xlu0 %1948
    %1950 = vadd.xlane.f32.xlu0 %v1919
    %v1951 = vpop.xlane.xlu0 %1950
    %1952 = vadd.xlane.f32.xlu0 %v1921
    %v1953 = vpop.xlane.xlu0 %1952
    %1954 = vadd.xlane.f32.xlu0 %v1923
    %v1955 = vpop.xlane.xlu0 %1954
    %1956 = vadd.xlane.f32.xlu0 %v1925
    %v1957 = vpop.xlane.xlu0 %1956
    %1958 = vadd.xlane.f32.xlu0 %v1927
    %v1959 = vpop.xlane.xlu0 %1958
    %1960 = vadd.xlane.f32.xlu0 %v1929
    %v1961 = vpop.xlane.xlu0 %1960
    %1962 = vadd.xlane.f32.xlu0 %v1931
    %v1963 = vpop.xlane.xlu0 %1962
    %1964 = vadd.xlane.f32.xlu0 %v1933
    %v1965 = vpop.xlane.xlu0 %1964
    %1966 = vadd.xlane.f32.xlu0 %v1935
    %v1967 = vpop.xlane.xlu0 %1966
    %v1968 = vrcp.pop %v1937
    %v1969 = vrcp.pop %v1939
    %v1970 = vrcp.pop %v1941
    %v1971 = vrcp.pop %v1943
    %v1972 = vrcp.pop %v1945
    %v1973 = vrcp.pop %v1947
    %v1974 = vrcp.pop %v1949
    %v1975 = vrcp.pop %v1951
    %v1976 = vrcp.pop %v1953
    %v1977 = vrcp.pop %v1955
    %v1978 = vrcp.pop %v1957
    %v1979 = vrcp.pop %v1959
    %v1980 = vrcp.pop %v1961
    %v1981 = vrcp.pop %v1963
    %v1982 = vrcp.pop %v1965
    %v1983 = vrcp.pop %v1967
    %v1984 = vmul.f32 %v1905, %v1968
    %v1985 = vmul.f32 %v1907, %v1969
    %v1986 = vmul.f32 %v1909, %v1970
    %v1987 = vmul.f32 %v1911, %v1971
    %v1988 = vmul.f32 %v1913, %v1972
    %v1989 = vmul.f32 %v1915, %v1973
    %v1990 = vmul.f32 %v1917, %v1974
    %v1991 = vmul.f32 %v1919, %v1975
    %v1992 = vmul.f32 %v1921, %v1976
    %v1993 = vmul.f32 %v1923, %v1977
    %v1994 = vmul.f32 %v1925, %v1978
    %v1995 = vmul.f32 %v1927, %v1979
    %v1996 = vmul.f32 %v1929, %v1980
    %v1997 = vmul.f32 %v1931, %v1981
    %v1998 = vmul.f32 %v1933, %v1982
    %v1999 = vmul.f32 %v1935, %v1983
    %2000 = vst [vmem:[#allocation16] sm:$0xff] %v1984
    %2001 = vst [vmem:[#allocation16 + $0x8] sm:$0xff] %v1985
    %2002 = vst [vmem:[#allocation16 + $0x10] sm:$0xff] %v1986
    %2003 = vst [vmem:[#allocation16 + $0x18] sm:$0xff] %v1987
    %2004 = vst [vmem:[#allocation16 + $0x20] sm:$0xff] %v1988
    %2005 = vst [vmem:[#allocation16 + $0x28] sm:$0xff] %v1989
    %2006 = vst [vmem:[#allocation16 + $0x30] sm:$0xff] %v1990
    %2007 = vst [vmem:[#allocation16 + $0x38] sm:$0xff] %v1991
    %2008 = vst [vmem:[#allocation16 + $0x40] sm:$0xff] %v1992
    %2009 = vst [vmem:[#allocation16 + $0x48] sm:$0xff] %v1993
    %2010 = vst [vmem:[#allocation16 + $0x50] sm:$0xff] %v1994
    %2011 = vst [vmem:[#allocation16 + $0x58] sm:$0xff] %v1995
    %2012 = vst [vmem:[#allocation16 + $0x60] sm:$0xff] %v1996
    %2013 = vst [vmem:[#allocation16 + $0x68] sm:$0xff] %v1997
    %2014 = vst [vmem:[#allocation16 + $0x70] sm:$0xff] %v1998
    %2015 = vst [vmem:[#allocation16 + $0x78] sm:$0xff] %v1999
    // Predicated region
    $region82: #{tpu_custom_call.1} parent=1 // pred_check
      _
    $region83: #{tpu_custom_call.1} parent=1 // pred_check_branch
      %2017 = sbr.rel (0) target = $region85
    $region84: #{tpu_custom_call.1} parent=1 // pred_region
      %s2019 = ssub.s32 2048, 2048
      %2020 = vsyncadd [#allocation4], %s2019
      %s2021 = sshll.u32 [#allocation16], 4
      %s2022 = int_to_ptr.vmem [resolvable:$true] %s2021
      %2027 = dma.vmem_to_hbm [thread:$0]  %s2022, 2048, %s12, [#allocation4], 128, 128, 8
    $region85: #{tpu_custom_call.1} parent=1 // pred_fallthru
      _
    // Predicated region
    $region86: #{tpu_custom_call.1} parent=1 // pred_check
      _
    $region87: #{tpu_custom_call.1} parent=1 // pred_check_branch
      %2029 = sbr.rel (0) target = $region89
    $region88: #{tpu_custom_call.1} parent=1 // pred_region
      %2030 = dma.done [#allocation4], 2048
    $region89: #{tpu_custom_call.1} parent=1 // pred_fallthru
      _
    %2031 = vsyncpa [#allocation3], 1
    %2032 = vsyncpa [#allocation6], 1
    %2033 = vsyncpa [#allocation9], 1
    %2034 = vsyncpa [#allocation12], 1
    %2035 = vsyncpa [#allocation15], 1
    %2036 = vsyncpa [#allocation4], 1

</llo_original>
